<compile_context>
chip_gen: v6e
topology: v6e:2x2x1
jax: 0.10.0
libtpu: 0.0.40
codegen_flags: <defaults>
</compile_context>

<pallas_src>
import functools

import jax
import jax.numpy as jnp
from jax.experimental import pallas as pl
from jax.experimental.pallas import tpu as pltpu


# ---------------------------------------------------------------------------
# Pallas kernels
# ---------------------------------------------------------------------------
def _conv_stats_kernel(w_ref, a_ref, s1_ref, s2_ref):
    # w_ref: (Cout_pad, K_pad) bf16 weights; a_ref: (K_pad, TM) bf16 patches^T.
    # One MXU matmul per grid step, f32 accumulation; emit this tile's
    # per-channel partial sum / sum-of-squares (lane reduce on the XLU).
    acc = jnp.dot(w_ref[...], a_ref[...], preferred_element_type=jnp.float32)
    # Zero-padded columns (and no bias) contribute exactly 0 -> no masking.
    s1_ref[0] = jnp.sum(acc, axis=1, keepdims=True)          # (Cout_pad, 1)
    s2_ref[0] = jnp.sum(acc * acc, axis=1, keepdims=True)    # (Cout_pad, 1)


def _conv_bn_kernel(s1_ref, s2_ref, gamma_ref, beta_ref, w_ref, a_ref, y_ref,
                    *, inv_count, eps):
    # Fold the BN scale/shift math into the apply kernel (tiny per-channel
    # column work: VPU + one EUP rsqrt), recomputed each grid step so the
    # "parallel" megacore split stays valid on v7x.
    mean = jnp.sum(s1_ref[...], axis=0) * inv_count           # (Cout_pad, 1)
    ex2 = jnp.sum(s2_ref[...], axis=0) * inv_count
    # Single-pass E[x^2]-E[x]^2 (biased, matches PyTorch BN normalization).
    # For activations with |mean| >> std consider a shifted/two-pass form.
    var = ex2 - mean * mean
    scale = gamma_ref[...] * jax.lax.rsqrt(var + eps)         # (Cout_pad, 1)
    shift = beta_ref[...] - mean * scale
    # Recompute the conv matmul (same bf16 operands, f32 acc -> bit-identical
    # to the stats pass) and write the lane-dense (Cout_pad, TM) output.
    acc = jnp.dot(w_ref[...], a_ref[...], preferred_element_type=jnp.float32)
    y_ref[...] = acc * scale + shift


# ---------------------------------------------------------------------------
# Host-side glue
# ---------------------------------------------------------------------------
def _extract_patches_t(x_ndhwc, ksize, stride, padding):
    """im2col, transposed: (N,D,H,W,C) -> (kD*kH*kW*C, N*Do*Ho*Wo).

    K-order = (kd, kh, kw, cin); M-order = (n, do, ho, wo).
    """
    N, D, H, W, C = x_ndhwc.shape
    xp = jnp.pad(
        x_ndhwc,
        ((0, 0), (padding, padding), (padding, padding), (padding, padding), (0, 0)),
    )
    Do = (D + 2 * padding - ksize) // stride + 1
    Ho = (H + 2 * padding - ksize) // stride + 1
    Wo = (W + 2 * padding - ksize) // stride + 1
    slices = []
    for a in range(ksize):
        for b in range(ksize):
            for c in range(ksize):
                sl = xp[
                    :,
                    a : a + Do * stride : stride,
                    b : b + Ho * stride : stride,
                    c : c + Wo * stride : stride,
                    :,
                ]
                slices.append(jnp.moveaxis(sl, 4, 0))  # (C, N, Do, Ho, Wo)
    pt = jnp.stack(slices, axis=0)                     # (k^3, C, N, Do, Ho, Wo)
    K = ksize * ksize * ksize * C
    M = N * Do * Ho * Wo
    return pt.reshape(K, M), (N, Do, Ho, Wo)


def conv3d_bn_forward(
    x_ncdhw, weight, bias, gamma, beta, *, stride, padding, eps=1e-3,
    compute_dtype=jnp.bfloat16,
):
    """Conv3d(stride, padding) followed by BatchNorm3d (training-mode batch stats)."""
    # The conv bias is exactly cancelled by the training-mode BN mean
    # subtraction, so it is not used (forward output is identical).
    del bias

    cout = weight.shape[0]
    ksize = weight.shape[2]

    # NCDHW -> NDHWC (channels-last), cast operands to the MXU compute dtype.
    x_ndhwc = jnp.transpose(x_ncdhw, (0, 2, 3, 4, 1)).astype(compute_dtype)
    patches_t, (N, Do, Ho, Wo) = _extract_patches_t(x_ndhwc, ksize, stride, padding)
    K, M = patches_t.shape

    Cout_pad = pl.cdiv(cout, 8) * 8            # sublane axis of the output
    K_pad = pl.cdiv(K, 128) * 128              # contracting axis
    M_128 = pl.cdiv(M, 128) * 128              # lane axis of the output
    TM = min(512, M_128)
    # Keep grid_m >= 2 when M allows it so v7x's 2 TensorCores both get work.
    if M_128 >= 256 and M_128 // TM < 2:
        TM = max(128, (M_128 // 2 // 128) * 128)
    M_pad = pl.cdiv(M_128, TM) * TM
    grid_m = M_pad // TM

    a = jnp.pad(patches_t, ((0, K_pad - K), (0, M_pad - M)))
    # weight (Cout, Cin, kD, kH, kW) -> (Cout, K) with K-order (kd, kh, kw, cin).
    w_mat = jnp.transpose(weight, (0, 2, 3, 4, 1)).reshape(cout, K)
    w_mat = jnp.pad(w_mat, ((0, Cout_pad - cout), (0, K_pad - K))).astype(compute_dtype)

    # --- 1) per-tile BN partial statistics (no conv_out written to HBM) -----
    s1, s2 = pl.pallas_call(
        _conv_stats_kernel,
        out_shape=(
            jax.ShapeDtypeStruct((grid_m, Cout_pad, 1), jnp.float32),
            jax.ShapeDtypeStruct((grid_m, Cout_pad, 1), jnp.float32),
        ),
        grid=(grid_m,),
        in_specs=[
            pl.BlockSpec((Cout_pad, K_pad), lambda i: (0, 0)),
            pl.BlockSpec((K_pad, TM), lambda i: (0, i)),
        ],
        out_specs=(
            pl.BlockSpec((1, Cout_pad, 1), lambda i: (i, 0, 0)),
            pl.BlockSpec((1, Cout_pad, 1), lambda i: (i, 0, 0)),
        ),
        compiler_params=pltpu.CompilerParams(dimension_semantics=("parallel",)),
    )(w_mat, a)

    # --- 2) recompute conv + apply BN, write lane-dense (Cout_pad, M_pad) ---
    gamma_p = jnp.pad(gamma.astype(jnp.float32), (0, Cout_pad - cout)).reshape(Cout_pad, 1)
    beta_p = jnp.pad(beta.astype(jnp.float32), (0, Cout_pad - cout)).reshape(Cout_pad, 1)

    y = pl.pallas_call(
        functools.partial(_conv_bn_kernel, inv_count=float(1.0 / M), eps=float(eps)),
        out_shape=jax.ShapeDtypeStruct((Cout_pad, M_pad), jnp.float32),
        grid=(grid_m,),
        in_specs=[
            pl.BlockSpec((grid_m, Cout_pad, 1), lambda i: (0, 0, 0)),
            pl.BlockSpec((grid_m, Cout_pad, 1), lambda i: (0, 0, 0)),
            pl.BlockSpec((Cout_pad, 1), lambda i: (0, 0)),
            pl.BlockSpec((Cout_pad, 1), lambda i: (0, 0)),
            pl.BlockSpec((Cout_pad, K_pad), lambda i: (0, 0)),
            pl.BlockSpec((K_pad, TM), lambda i: (0, i)),
        ],
        out_specs=pl.BlockSpec((Cout_pad, TM), lambda i: (0, i)),
        compiler_params=pltpu.CompilerParams(dimension_semantics=("parallel",)),
    )(s1, s2, gamma_p, beta_p, w_mat, a)

    # (Cout, M) with M-order (n, do, ho, wo) -> NCDHW.
    y = y[:cout, :M].reshape(cout, N, Do, Ho, Wo)
    return jnp.transpose(y, (1, 0, 2, 3, 4))


# ---------------------------------------------------------------------------
# Reference (pure JAX) for verification
# ---------------------------------------------------------------------------
def _reference(x, weight, bias, gamma, beta, *, stride, padding, eps=1e-3):
    conv = jax.lax.conv_general_dilated(
        x,
        weight,
        window_strides=(stride, stride, stride),
        padding=[(padding, padding)] * 3,
        dimension_numbers=("NCDHW", "OIDHW", "NCDHW"),
        precision=jax.lax.Precision.HIGHEST,
    ) + bias[None, :, None, None, None]
    mean = jnp.mean(conv, axis=(0, 2, 3, 4), keepdims=True)
    var = jnp.mean((conv - mean) ** 2, axis=(0, 2, 3, 4), keepdims=True)
    g = gamma[None, :, None, None, None]
    b = beta[None, :, None, None, None]
    return (conv - mean) * jax.lax.rsqrt(var + eps) * g + b


if __name__ == "__main__":
    # Module config: Conv3dBlockwoReLU(in_channel=4, out_channel=8, kernel_size=3,
    #                                  stride=1, padding=1)
    N, Cin, Cout = 2, 4, 8
    D = H = W = 8
    ksize, stride, padding = 3, 1, 1
    eps = 0.001

    key = jax.random.PRNGKey(0)
    kx, kw, kb = jax.random.split(key, 3)
    x = jax.random.normal(kx, (N, Cin, D, H, W), jnp.float32)
    weight = 0.1 * jax.random.normal(kw, (Cout, Cin, ksize, ksize, ksize), jnp.float32)
    bias = 0.1 * jax.random.normal(kb, (Cout,), jnp.float32)
    gamma = jnp.ones((Cout,), jnp.float32)   # BatchNorm3d default weight init
    beta = jnp.zeros((Cout,), jnp.float32)   # BatchNorm3d default bias init

    fwd = jax.jit(
        functools.partial(conv3d_bn_forward, stride=stride, padding=padding, eps=eps)
    )
    out = jax.block_until_ready(fwd(x, weight, bias, gamma, beta))

    # True f32 reference (module semantics) — loose tolerance covers the bf16
    # operand rounding introduced by the native-MXU cast.
    ref_f32 = _reference(
        x, weight, bias, gamma, beta, stride=stride, padding=padding, eps=eps
    )
    # Reference with the same bf16-rounded operands (f32 accumulation) — tight check.
    xb = x.astype(jnp.bfloat16).astype(jnp.float32)
    wb = weight.astype(jnp.bfloat16).astype(jnp.float32)
    ref_bf = _reference(
        xb, wb, bias, gamma, beta, stride=stride, padding=padding, eps=eps
    )

    assert out.shape == ref_f32.shape, (out.shape, ref_f32.shape)
    assert jnp.allclose(out, ref_bf, atol=2e-3, rtol=2e-3), float(
        jnp.max(jnp.abs(out - ref_bf))
    )
    assert jnp.allclose(out, ref_f32, atol=2e-2, rtol=2e-2), float(
        jnp.max(jnp.abs(out - ref_f32))
    )

    print("KERNEL_OK")
</pallas_src>

<mosaic_0001>
module attributes {stable_mosaic.version = 11 : i64} {
  func.func @_conv_stats_kernel(%arg0: i32, %arg1: memref<8x128xbf16, #tpu.memory_space<vmem>>, %arg2: memref<128x512xbf16, #tpu.memory_space<vmem>>, %arg3: memref<1x8x1xf32, #tpu.memory_space<vmem>>, %arg4: memref<1x8x1xf32, #tpu.memory_space<vmem>>) attributes {dimension_semantics = [#tpu.dimension_semantics<parallel>], iteration_bounds = array<i64: 2>, scalar_prefetch = 0 : i64, scratch_operands = 0 : i64, tpu.core_type = #tpu.core_type<tc>, window_params = [{pipeline_mode = #tpu.pipeline_mode<synchronous>, transform_indices = @transform_0, window_bounds = array<i64: 8, 128>}, {transform_indices = @transform_1, window_bounds = array<i64: 128, 512>}, {transform_indices = @transform_2, window_bounds = array<i64: 1, 8, 1>}, {transform_indices = @transform_3, window_bounds = array<i64: 1, 8, 1>}]} {
    %c0 = arith.constant 0 : index
    %c0_0 = arith.constant 0 : index
    %0 = vector.load %arg1[%c0, %c0_0] : memref<8x128xbf16, #tpu.memory_space<vmem>>, vector<8x128xbf16>
    %c0_1 = arith.constant 0 : index
    %c0_2 = arith.constant 0 : index
    %1 = vector.load %arg2[%c0_1, %c0_2] : memref<128x512xbf16, #tpu.memory_space<vmem>>, vector<128x512xbf16>
    %cst = arith.constant dense<0.000000e+00> : vector<8x512xf32>
    %2 = tpu.matmul %0, %1, %cst {dimension_numbers = #tpu.dot_dimension_numbers<[1], [0], [0], [1], [0, 0, 1, 1], [], []>} : vector<8x128xbf16>, vector<128x512xbf16>, vector<8x512xf32> -> vector<8x512xf32>
    %cst_3 = arith.constant dense<0.000000e+00> : vector<8xf32>
    %3 = vector.multi_reduction <add>, %2, %cst_3 [1] : vector<8x512xf32> to vector<8xf32>
    %4 = vector.shape_cast %3 : vector<8xf32> to vector<8x1xf32>
    %c0_4 = arith.constant 0 : index
    %c0_5 = arith.constant 0 : index
    %c0_6 = arith.constant 0 : index
    %5 = vector.load %arg3[%c0_4, %c0_5, %c0_6] : memref<1x8x1xf32, #tpu.memory_space<vmem>>, vector<1x8x1xf32>
    %6 = vector.shape_cast %5 : vector<1x8x1xf32> to vector<8x1xf32>
    %7 = vector.shape_cast %4 : vector<8x1xf32> to vector<1x8x1xf32>
    tpu.vector_store %arg3[%c0_4, %c0_5, %c0_6], %7 {strides = array<i32>} : memref<1x8x1xf32, #tpu.memory_space<vmem>>, vector<1x8x1xf32>,
    %8 = arith.mulf %2, %2 : vector<8x512xf32>
    %cst_7 = arith.constant dense<0.000000e+00> : vector<8xf32>
    %9 = vector.multi_reduction <add>, %8, %cst_7 [1] : vector<8x512xf32> to vector<8xf32>
    %10 = vector.shape_cast %9 : vector<8xf32> to vector<8x1xf32>
    %c0_8 = arith.constant 0 : index
    %c0_9 = arith.constant 0 : index
    %c0_10 = arith.constant 0 : index
    %11 = vector.load %arg4[%c0_8, %c0_9, %c0_10] : memref<1x8x1xf32, #tpu.memory_space<vmem>>, vector<1x8x1xf32>
    %12 = vector.shape_cast %11 : vector<1x8x1xf32> to vector<8x1xf32>
    %13 = vector.shape_cast %10 : vector<8x1xf32> to vector<1x8x1xf32>
    tpu.vector_store %arg4[%c0_8, %c0_9, %c0_10], %13 {strides = array<i32>} : memref<1x8x1xf32, #tpu.memory_space<vmem>>, vector<1x8x1xf32>,
    return
  }
  func.func @transform_0(%arg0: i32) -> (i32, i32) {
    %c0_i32 = arith.constant 0 : i32
    %c0_i32_0 = arith.constant 0 : i32
    %c0_i32_1 = arith.constant 0 : i32
    return %c0_i32, %c0_i32_0 : i32, i32
  }
  func.func @transform_1(%arg0: i32) -> (i32, i32) {
    %c0_i32 = arith.constant 0 : i32
    %c0_i32_0 = arith.constant 0 : i32
    return %c0_i32, %arg0 : i32, i32
  }
  func.func @transform_2(%arg0: i32) -> (i32, i32, i32) {
    %c0_i32 = arith.constant 0 : i32
    %c0_i32_0 = arith.constant 0 : i32
    %c0_i32_1 = arith.constant 0 : i32
    return %arg0, %c0_i32, %c0_i32_0 : i32, i32, i32
  }
  func.func @transform_3(%arg0: i32) -> (i32, i32, i32) {
    %c0_i32 = arith.constant 0 : i32
    %c0_i32_0 = arith.constant 0 : i32
    %c0_i32_1 = arith.constant 0 : i32
    return %arg0, %c0_i32, %c0_i32_0 : i32, i32, i32
  }
}

module attributes {stable_mosaic.version = 11 : i64} {
  func.func @_conv_bn_kernel(%arg0: i32, %arg1: memref<2x8x1xf32, #tpu.memory_space<vmem>>, %arg2: memref<2x8x1xf32, #tpu.memory_space<vmem>>, %arg3: memref<8x1xf32, #tpu.memory_space<vmem>>, %arg4: memref<8x1xf32, #tpu.memory_space<vmem>>, %arg5: memref<8x128xbf16, #tpu.memory_space<vmem>>, %arg6: memref<128x512xbf16, #tpu.memory_space<vmem>>, %arg7: memref<8x512xf32, #tpu.memory_space<vmem>>) attributes {dimension_semantics = [#tpu.dimension_semantics<parallel>], iteration_bounds = array<i64: 2>, scalar_prefetch = 0 : i64, scratch_operands = 0 : i64, tpu.core_type = #tpu.core_type<tc>, window_params = [{pipeline_mode = #tpu.pipeline_mode<synchronous>, transform_indices = @transform_0, window_bounds = array<i64: 2, 8, 1>}, {pipeline_mode = #tpu.pipeline_mode<synchronous>, transform_indices = @transform_1, window_bounds = array<i64: 2, 8, 1>}, {pipeline_mode = #tpu.pipeline_mode<synchronous>, transform_indices = @transform_2, window_bounds = array<i64: 8, 1>}, {pipeline_mode = #tpu.pipeline_mode<synchronous>, transform_indices = @transform_3, window_bounds = array<i64: 8, 1>}, {pipeline_mode = #tpu.pipeline_mode<synchronous>, transform_indices = @transform_4, window_bounds = array<i64: 8, 128>}, {transform_indices = @transform_5, window_bounds = array<i64: 128, 512>}, {transform_indices = @transform_6, window_bounds = array<i64: 8, 512>}]} {
    %c0 = arith.constant 0 : index
    %c0_0 = arith.constant 0 : index
    %c0_1 = arith.constant 0 : index
    %0 = vector.load %arg1[%c0, %c0_0, %c0_1] : memref<2x8x1xf32, #tpu.memory_space<vmem>>, vector<2x8x1xf32>
    %cst = arith.constant dense<0.000000e+00> : vector<8x1xf32>
    %1 = vector.multi_reduction <add>, %0, %cst [0] : vector<2x8x1xf32> to vector<8x1xf32>
    %cst_2 = arith.constant 9.765625E-4 : f32
    %2 = vector.broadcast %cst_2 : f32 to vector<8x1xf32>
    %3 = arith.mulf %1, %2 : vector<8x1xf32>
    %c0_3 = arith.constant 0 : index
    %c0_4 = arith.constant 0 : index
    %c0_5 = arith.constant 0 : index
    %4 = vector.load %arg2[%c0_3, %c0_4, %c0_5] : memref<2x8x1xf32, #tpu.memory_space<vmem>>, vector<2x8x1xf32>
    %cst_6 = arith.constant dense<0.000000e+00> : vector<8x1xf32>
    %5 = vector.multi_reduction <add>, %4, %cst_6 [0] : vector<2x8x1xf32> to vector<8x1xf32>
    %cst_7 = arith.constant 9.765625E-4 : f32
    %6 = vector.broadcast %cst_7 : f32 to vector<8x1xf32>
    %7 = arith.mulf %5, %6 : vector<8x1xf32>
    %8 = arith.mulf %3, %3 : vector<8x1xf32>
    %9 = arith.subf %7, %8 : vector<8x1xf32>
    %c0_8 = arith.constant 0 : index
    %c0_9 = arith.constant 0 : index
    %10 = vector.load %arg3[%c0_8, %c0_9] : memref<8x1xf32, #tpu.memory_space<vmem>>, vector<8x1xf32>
    %cst_10 = arith.constant 1.000000e-03 : f32
    %11 = vector.broadcast %cst_10 : f32 to vector<8x1xf32>
    %12 = arith.addf %9, %11 : vector<8x1xf32>
    %13 = math.rsqrt %12 : vector<8x1xf32>
    %14 = arith.mulf %10, %13 : vector<8x1xf32>
    %c0_11 = arith.constant 0 : index
    %c0_12 = arith.constant 0 : index
    %15 = vector.load %arg4[%c0_11, %c0_12] : memref<8x1xf32, #tpu.memory_space<vmem>>, vector<8x1xf32>
    %16 = arith.mulf %3, %14 : vector<8x1xf32>
    %17 = arith.subf %15, %16 : vector<8x1xf32>
    %c0_13 = arith.constant 0 : index
    %c0_14 = arith.constant 0 : index
    %18 = vector.load %arg5[%c0_13, %c0_14] : memref<8x128xbf16, #tpu.memory_space<vmem>>, vector<8x128xbf16>
    %c0_15 = arith.constant 0 : index
    %c0_16 = arith.constant 0 : index
    %19 = vector.load %arg6[%c0_15, %c0_16] : memref<128x512xbf16, #tpu.memory_space<vmem>>, vector<128x512xbf16>
    %cst_17 = arith.constant dense<0.000000e+00> : vector<8x512xf32>
    %20 = tpu.matmul %18, %19, %cst_17 {dimension_numbers = #tpu.dot_dimension_numbers<[1], [0], [0], [1], [0, 0, 1, 1], [], []>} : vector<8x128xbf16>, vector<128x512xbf16>, vector<8x512xf32> -> vector<8x512xf32>
    %21 = vector.broadcast %14 : vector<8x1xf32> to vector<8x512xf32>
    %22 = arith.mulf %20, %21 : vector<8x512xf32>
    %23 = vector.broadcast %17 : vector<8x1xf32> to vector<8x512xf32>
    %24 = arith.addf %22, %23 : vector<8x512xf32>
    %c0_18 = arith.constant 0 : index
    %c0_19 = arith.constant 0 : index
    %25 = vector.load %arg7[%c0_18, %c0_19] : memref<8x512xf32, #tpu.memory_space<vmem>>, vector<8x512xf32>
    tpu.vector_store %arg7[%c0_18, %c0_19], %24 {strides = array<i32>} : memref<8x512xf32, #tpu.memory_space<vmem>>, vector<8x512xf32>,
    return
  }
  func.func @transform_0(%arg0: i32) -> (i32, i32, i32) {
    %c0_i32 = arith.constant 0 : i32
    %c0_i32_0 = arith.constant 0 : i32
    %c0_i32_1 = arith.constant 0 : i32
    %c0_i32_2 = arith.constant 0 : i32
    return %c0_i32, %c0_i32_0, %c0_i32_1 : i32, i32, i32
  }
  func.func @transform_1(%arg0: i32) -> (i32, i32, i32) {
    %c0_i32 = arith.constant 0 : i32
    %c0_i32_0 = arith.constant 0 : i32
    %c0_i32_1 = arith.constant 0 : i32
    %c0_i32_2 = arith.constant 0 : i32
    return %c0_i32, %c0_i32_0, %c0_i32_1 : i32, i32, i32
  }
  func.func @transform_2(%arg0: i32) -> (i32, i32) {
    %c0_i32 = arith.constant 0 : i32
    %c0_i32_0 = arith.constant 0 : i32
    %c0_i32_1 = arith.constant 0 : i32
    return %c0_i32, %c0_i32_0 : i32, i32
  }
  func.func @transform_3(%arg0: i32) -> (i32, i32) {
    %c0_i32 = arith.constant 0 : i32
    %c0_i32_0 = arith.constant 0 : i32
    %c0_i32_1 = arith.constant 0 : i32
    return %c0_i32, %c0_i32_0 : i32, i32
  }
  func.func @transform_4(%arg0: i32) -> (i32, i32) {
    %c0_i32 = arith.constant 0 : i32
    %c0_i32_0 = arith.constant 0 : i32
    %c0_i32_1 = arith.constant 0 : i32
    return %c0_i32, %c0_i32_0 : i32, i32
  }
  func.func @transform_5(%arg0: i32) -> (i32, i32) {
    %c0_i32 = arith.constant 0 : i32
    %c0_i32_0 = arith.constant 0 : i32
    return %c0_i32, %arg0 : i32, i32
  }
  func.func @transform_6(%arg0: i32) -> (i32, i32) {
    %c0_i32 = arith.constant 0 : i32
    %c0_i32_0 = arith.constant 0 : i32
    return %c0_i32, %arg0 : i32, i32
  }
}

</mosaic_0001>

<llo_original>
// kernel: conv3d_bn_forward.3
$region0: #{conv3d_bn_forward.3}
  #allocation0 [shape = 'u32[]', space=smem, size = 0x4, offset = 0x4, fixed_abs, tag = 'smem constant byte address 0x4 - core index']
  #allocation1 [shape = 'u32[144,128]{1,0:T(1,128)}', space=vmem, size = 0x12000, scoped, tag = 'internal scratch']
  %s0 = inlined_call_operand.vmem [shape: f32[2,8,1], index: 0, kind: input, shape index: {}]
  %s1 = inlined_call_operand.vmem [shape: f32[2,8,1], index: 1, kind: input, shape index: {}]
  %s2 = inlined_call_operand.vmem [shape: f32[8,1], index: 2, kind: input, shape index: {}]
  %s3 = inlined_call_operand.vmem [shape: f32[8,1], index: 3, kind: input, shape index: {}]
  %s4 = inlined_call_operand.vmem [shape: bf16[8,128], index: 4, kind: input, shape index: {}]
  %s5 = inlined_call_operand.vmem [shape: bf16[128,1024], index: 5, kind: input, shape index: {}]
  %s6 = inlined_call_operand.vmem [shape: f32[8,1024], index: 6, kind: output, shape index: {}]
  %s7 = sld [smem:[#allocation0]]
  $region80: #{conv3d_bn_forward.3} parent=0
    _
  %s9 = ssub.s32 1, %s7
  %s10 = scalar_select 0, %s9, %s7
  $region1: #{conv3d_bn_forward.3} parent=0
    #allocation2 [shape = 'u8[262144]{0}', space=vmem, size = 0x40000, scoped, tag = 'input window, operand 5']
    loop: start=0, step=1, limit=4
    $region2: #{conv3d_bn_forward.3} parent=1 // loop_pre_header
      _
    $region3: #{conv3d_bn_forward.3} parent=1 // loop_header
      %s12 = sphi 0, %s16
      %p13 = scmp.ge.s32.totalorder %s12, 4
      %s20 = sphi 0, %s20
      %s22 = sphi 0, %s20
      %s23 = sphi 0, %s22
      %s37 = sphi 0, %s23
      %s41 = sphi 0, %s41
      %s43 = sphi 0, %s41
      %s44 = sphi 0, %s43
      %s58 = sphi 0, %s44
      %s62 = sphi 0, %s62
      %s64 = sphi 0, %s62
      %s65 = sphi 0, %s64
      %s79 = sphi 0, %s65
      %s83 = sphi 0, %s83
      %s85 = sphi 0, %s83
      %s86 = sphi 0, %s85
      %s100 = sphi 0, %s86
      %s104 = sphi 0, %s104
      %s106 = sphi 0, %s104
      %s107 = sphi 0, %s106
      %s121 = sphi 0, %s107
      %s127 = sphi 0, %s129
      %s130 = sphi 0, %s127
      %s131 = sphi 0, %s130
      %s147 = sphi 0, %s131
      %s153 = sphi 0, %s155
      %s156 = sphi 0, %s153
      %s157 = sphi 0, %s156
      %s173 = sphi 0, %s157
    $region4: #{conv3d_bn_forward.3} parent=1 // loop_header_branch
      %15 = sbr.rel (%p13) target = $region8
    $region5: #{conv3d_bn_forward.3} parent=1 // loop_body
      %s17 = ssub.s32 %s12, 1
      %s18 = ssub.s32 %s12, 2
      %s19 = sadd.s32 %s12, 1
      %s21 = sadd.s32 %s20, 1
      %p24 = scmp.eq.s32.totalorder %s12, 1
      %p25 = scmp.ne.s32.totalorder %s20, %s22
      %p26 = scmp.eq.s32.totalorder %s12, 0
      %p27 = por %p25, %p26
      %p28 = scmp.ne.s32.totalorder %s20, %s22
      %p29 = scmp.eq.s32.totalorder %s17, 1
      %p30 = por %p28, %p29
      %p31 = scmp.ne.s32.totalorder %s22, %s23
      %p32 = scmp.eq.s32.totalorder %s17, 0
      %p33 = por %p31, %p32
      %p34 = scmp.ne.s32.totalorder %s22, %s23
      %p35 = scmp.eq.s32.totalorder %s18, 1
      %p36 = por %p34, %p35
      %p38 = scmp.ne.s32.totalorder %s23, %s37
      %p39 = scmp.eq.s32.totalorder %s18, 0
      %p40 = por %p38, %p39
      %s42 = sadd.s32 %s41, 1
      %p45 = scmp.eq.s32.totalorder %s12, 1
      %p46 = scmp.ne.s32.totalorder %s41, %s43
      %p47 = scmp.eq.s32.totalorder %s12, 0
      %p48 = por %p46, %p47
      %p49 = scmp.ne.s32.totalorder %s41, %s43
      %p50 = scmp.eq.s32.totalorder %s17, 1
      %p51 = por %p49, %p50
      %p52 = scmp.ne.s32.totalorder %s43, %s44
      %p53 = scmp.eq.s32.totalorder %s17, 0
      %p54 = por %p52, %p53
      %p55 = scmp.ne.s32.totalorder %s43, %s44
      %p56 = scmp.eq.s32.totalorder %s18, 1
      %p57 = por %p55, %p56
      %p59 = scmp.ne.s32.totalorder %s44, %s58
      %p60 = scmp.eq.s32.totalorder %s18, 0
      %p61 = por %p59, %p60
      %s63 = sadd.s32 %s62, 1
      %p66 = scmp.eq.s32.totalorder %s12, 1
      %p67 = scmp.ne.s32.totalorder %s62, %s64
      %p68 = scmp.eq.s32.totalorder %s12, 0
      %p69 = por %p67, %p68
      %p70 = scmp.ne.s32.totalorder %s62, %s64
      %p71 = scmp.eq.s32.totalorder %s17, 1
      %p72 = por %p70, %p71
      %p73 = scmp.ne.s32.totalorder %s64, %s65
      %p74 = scmp.eq.s32.totalorder %s17, 0
      %p75 = por %p73, %p74
      %p76 = scmp.ne.s32.totalorder %s64, %s65
      %p77 = scmp.eq.s32.totalorder %s18, 1
      %p78 = por %p76, %p77
      %p80 = scmp.ne.s32.totalorder %s65, %s79
      %p81 = scmp.eq.s32.totalorder %s18, 0
      %p82 = por %p80, %p81
      %s84 = sadd.s32 %s83, 1
      %p87 = scmp.eq.s32.totalorder %s12, 1
      %p88 = scmp.ne.s32.totalorder %s83, %s85
      %p89 = scmp.eq.s32.totalorder %s12, 0
      %p90 = por %p88, %p89
      %p91 = scmp.ne.s32.totalorder %s83, %s85
      %p92 = scmp.eq.s32.totalorder %s17, 1
      %p93 = por %p91, %p92
      %p94 = scmp.ne.s32.totalorder %s85, %s86
      %p95 = scmp.eq.s32.totalorder %s17, 0
      %p96 = por %p94, %p95
      %p97 = scmp.ne.s32.totalorder %s85, %s86
      %p98 = scmp.eq.s32.totalorder %s18, 1
      %p99 = por %p97, %p98
      %p101 = scmp.ne.s32.totalorder %s86, %s100
      %p102 = scmp.eq.s32.totalorder %s18, 0
      %p103 = por %p101, %p102
      %s105 = sadd.s32 %s104, 1
      %p108 = scmp.eq.s32.totalorder %s12, 1
      %p109 = scmp.ne.s32.totalorder %s104, %s106
      %p110 = scmp.eq.s32.totalorder %s12, 0
      %p111 = por %p109, %p110
      %p112 = scmp.ne.s32.totalorder %s104, %s106
      %p113 = scmp.eq.s32.totalorder %s17, 1
      %p114 = por %p112, %p113
      %p115 = scmp.ne.s32.totalorder %s106, %s107
      %p116 = scmp.eq.s32.totalorder %s17, 0
      %p117 = por %p115, %p116
      %p118 = scmp.ne.s32.totalorder %s106, %s107
      %p119 = scmp.eq.s32.totalorder %s18, 1
      %p120 = por %p118, %p119
      %p122 = scmp.ne.s32.totalorder %s107, %s121
      %p123 = scmp.eq.s32.totalorder %s18, 0
      %p124 = por %p122, %p123
      %s125 = ssub.s32 %s12, %s19
      %p126 = scmp.eq.s32.totalorder %s125, 0
      %s128 = sadd.s32 %s127, 1
      %s129 = scalar_select %p126, %s127, %s128
      %p132 = pneg %p126
      %p133 = scmp.eq.s32.totalorder %s12, 1
      %p134 = por %p132, %p133
      %p135 = scmp.ne.s32.totalorder %s127, %s130
      %p136 = scmp.eq.s32.totalorder %s12, 0
      %p137 = por %p135, %p136
      %p138 = scmp.ne.s32.totalorder %s127, %s130
      %p139 = scmp.eq.s32.totalorder %s17, 1
      %p140 = por %p138, %p139
      %p141 = scmp.ne.s32.totalorder %s130, %s131
      %p142 = scmp.eq.s32.totalorder %s17, 0
      %p143 = por %p141, %p142
      %p144 = scmp.ne.s32.totalorder %s130, %s131
      %p145 = scmp.eq.s32.totalorder %s18, 1
      %p146 = por %p144, %p145
      %p148 = scmp.ne.s32.totalorder %s131, %s147
      %p149 = scmp.eq.s32.totalorder %s18, 0
      %p150 = por %p148, %p149
      %s151 = ssub.s32 %s12, %s19
      %p152 = scmp.eq.s32.totalorder %s151, 0
      %s154 = sadd.s32 %s153, 1
      %s155 = scalar_select %p152, %s153, %s154
      %p158 = pneg %p152
      %p159 = scmp.eq.s32.totalorder %s12, 1
      %p160 = por %p158, %p159
      %p161 = scmp.ne.s32.totalorder %s153, %s156
      %p162 = scmp.eq.s32.totalorder %s12, 0
      %p163 = por %p161, %p162
      %p164 = scmp.ne.s32.totalorder %s153, %s156
      %p165 = scmp.eq.s32.totalorder %s17, 1
      %p166 = por %p164, %p165
      %p167 = scmp.ne.s32.totalorder %s156, %s157
      %p168 = scmp.eq.s32.totalorder %s17, 0
      %p169 = por %p167, %p168
      %p170 = scmp.ne.s32.totalorder %s156, %s157
      %p171 = scmp.eq.s32.totalorder %s18, 1
      %p172 = por %p170, %p171
      %p174 = scmp.ne.s32.totalorder %s157, %s173
      %p175 = scmp.eq.s32.totalorder %s18, 0
      %p176 = por %p174, %p175
      %p177 = scmp.le.s32.totalorder 1, %s12
      %p178 = scmp.lt.s32.totalorder %s12, 3
      %p179 = pnand %p177, %p178
      %p180 = pneg %p179
      // Predicated region
      $region9: #{conv3d_bn_forward.3} parent=5 // pred_check
        _
      $region10: #{conv3d_bn_forward.3} parent=5 // pred_check_branch
        %182 = sbr.rel (%p179) target = $region12
      $region11: #{conv3d_bn_forward.3} parent=5 // pred_region
        %s183 = ssub.s32 %s12, 1
        // Predicated region
        $region13: #{conv3d_bn_forward.3} parent=11 // pred_check
          %p184 = pneg %p33
        $region14: #{conv3d_bn_forward.3} parent=11 // pred_check_branch
          %186 = sbr.rel (%p184) target = $region16
        $region15: #{conv3d_bn_forward.3} parent=11 // pred_region
          _
        $region16: #{conv3d_bn_forward.3} parent=11 // pred_fallthru
          _
        // Predicated region
        $region17: #{conv3d_bn_forward.3} parent=11 // pred_check
          %p187 = pneg %p54
        $region18: #{conv3d_bn_forward.3} parent=11 // pred_check_branch
          %189 = sbr.rel (%p187) target = $region20
        $region19: #{conv3d_bn_forward.3} parent=11 // pred_region
          _
        $region20: #{conv3d_bn_forward.3} parent=11 // pred_fallthru
          _
        // Predicated region
        $region21: #{conv3d_bn_forward.3} parent=11 // pred_check
          %p190 = pneg %p75
        $region22: #{conv3d_bn_forward.3} parent=11 // pred_check_branch
          %192 = sbr.rel (%p190) target = $region24
        $region23: #{conv3d_bn_forward.3} parent=11 // pred_region
          _
        $region24: #{conv3d_bn_forward.3} parent=11 // pred_fallthru
          _
        // Predicated region
        $region25: #{conv3d_bn_forward.3} parent=11 // pred_check
          %p193 = pneg %p96
        $region26: #{conv3d_bn_forward.3} parent=11 // pred_check_branch
          %195 = sbr.rel (%p193) target = $region28
        $region27: #{conv3d_bn_forward.3} parent=11 // pred_region
          _
        $region28: #{conv3d_bn_forward.3} parent=11 // pred_fallthru
          _
        // Predicated region
        $region29: #{conv3d_bn_forward.3} parent=11 // pred_check
          %p196 = pneg %p117
        $region30: #{conv3d_bn_forward.3} parent=11 // pred_check_branch
          %198 = sbr.rel (%p196) target = $region32
        $region31: #{conv3d_bn_forward.3} parent=11 // pred_region
          _
        $region32: #{conv3d_bn_forward.3} parent=11 // pred_fallthru
          _
      $region12: #{conv3d_bn_forward.3} parent=5 // pred_fallthru
        _
      %p199 = scmp.lt.s32.totalorder %s12, 2
      // Predicated region
      $region33: #{conv3d_bn_forward.3} parent=5 // pred_check
        %p200 = pneg %p199
      $region34: #{conv3d_bn_forward.3} parent=5 // pred_check_branch
        %202 = sbr.rel (%p200) target = $region36
      $region35: #{conv3d_bn_forward.3} parent=5 // pred_region
        // Predicated region
        $region37: #{conv3d_bn_forward.3} parent=35 // pred_check
          %p203 = pneg %p137
        $region38: #{conv3d_bn_forward.3} parent=35 // pred_check_branch
          %205 = sbr.rel (%p203) target = $region40
        $region39: #{conv3d_bn_forward.3} parent=35 // pred_region
          %s206 = sand.u32 %s127, 1
          %s207 = sand.u32 %s127, 1
          %s208 = smul.addr %s207, 256
          %s209 = scalar_lea.vmem [#allocation2], %s208
          %s210 = smul.u32 4, %s12
          %s211 = smul.addr %s210, 4
          %s212 = scalar_lea.vmem %s5, %s211
          // Predicated region
          $region41: #{conv3d_bn_forward.3} parent=39 // pred_check
            _
          $region42: #{conv3d_bn_forward.3} parent=39 // pred_check_branch
            %214 = sbr.rel (0) target = $region44
          $region43: #{conv3d_bn_forward.3} parent=39 // pred_region
            // Predicated region
            $region45: #{conv3d_bn_forward.3} parent=43 // pred_check
              _
            $region46: #{conv3d_bn_forward.3} parent=43 // pred_check_branch
              %216 = sbr.rel (0) target = $region48
            $region47: #{conv3d_bn_forward.3} parent=43 // pred_region
              loop: start=0, step=1, limit=1
              $region49: #{conv3d_bn_forward.3} parent=47 // loop_pre_header
                _
              $region50: #{conv3d_bn_forward.3} parent=47 // loop_header
                %s218 = sphi 0, %s222
                %p219 = scmp.ge.s32.totalorder %s218, 1
                %s223 = sphi %s212, %s212
                %s224 = sphi %s209, %s209
              $region51: #{conv3d_bn_forward.3} parent=47 // loop_header_branch
                %221 = sbr.rel (%p219) target = $region55
              $region52: #{conv3d_bn_forward.3} parent=47 // loop_body
                %v225 = vld [vmem:[%s223] sm:$0xff]
                %226 = vst [vmem:[%s224] sm:$0xff] %v225
                %v227 = vld [vmem:[%s223 + $0x8] sm:$0xff]
                %228 = vst [vmem:[%s224 + $0x8] sm:$0xff] %v227
                %v229 = vld [vmem:[%s223 + $0x20] sm:$0xff]
                %230 = vst [vmem:[%s224 + $0x10] sm:$0xff] %v229
                %v231 = vld [vmem:[%s223 + $0x28] sm:$0xff]
                %232 = vst [vmem:[%s224 + $0x18] sm:$0xff] %v231
                %v233 = vld [vmem:[%s223 + $0x40] sm:$0xff]
                %234 = vst [vmem:[%s224 + $0x20] sm:$0xff] %v233
                %v235 = vld [vmem:[%s223 + $0x48] sm:$0xff]
                %236 = vst [vmem:[%s224 + $0x28] sm:$0xff] %v235
                %v237 = vld [vmem:[%s223 + $0x60] sm:$0xff]
                %238 = vst [vmem:[%s224 + $0x30] sm:$0xff] %v237
                %v239 = vld [vmem:[%s223 + $0x68] sm:$0xff]
                %240 = vst [vmem:[%s224 + $0x38] sm:$0xff] %v239
                %v241 = vld [vmem:[%s223 + $0x80] sm:$0xff]
                %242 = vst [vmem:[%s224 + $0x40] sm:$0xff] %v241
                %v243 = vld [vmem:[%s223 + $0x88] sm:$0xff]
                %244 = vst [vmem:[%s224 + $0x48] sm:$0xff] %v243
                %v245 = vld [vmem:[%s223 + $0xa0] sm:$0xff]
                %246 = vst [vmem:[%s224 + $0x50] sm:$0xff] %v245
                %v247 = vld [vmem:[%s223 + $0xa8] sm:$0xff]
                %248 = vst [vmem:[%s224 + $0x58] sm:$0xff] %v247
                %v249 = vld [vmem:[%s223 + $0xc0] sm:$0xff]
                %250 = vst [vmem:[%s224 + $0x60] sm:$0xff] %v249
                %v251 = vld [vmem:[%s223 + $0xc8] sm:$0xff]
                %252 = vst [vmem:[%s224 + $0x68] sm:$0xff] %v251
                %v253 = vld [vmem:[%s223 + $0xe0] sm:$0xff]
                %254 = vst [vmem:[%s224 + $0x70] sm:$0xff] %v253
                %v255 = vld [vmem:[%s223 + $0xe8] sm:$0xff]
                %256 = vst [vmem:[%s224 + $0x78] sm:$0xff] %v255
                %v257 = vld [vmem:[%s223 + $0x100] sm:$0xff]
                %258 = vst [vmem:[%s224 + $0x80] sm:$0xff] %v257
                %v259 = vld [vmem:[%s223 + $0x108] sm:$0xff]
                %260 = vst [vmem:[%s224 + $0x88] sm:$0xff] %v259
                %v261 = vld [vmem:[%s223 + $0x120] sm:$0xff]
                %262 = vst [vmem:[%s224 + $0x90] sm:$0xff] %v261
                %v263 = vld [vmem:[%s223 + $0x128] sm:$0xff]
                %264 = vst [vmem:[%s224 + $0x98] sm:$0xff] %v263
                %v265 = vld [vmem:[%s223 + $0x140] sm:$0xff]
                %266 = vst [vmem:[%s224 + $0xa0] sm:$0xff] %v265
                %v267 = vld [vmem:[%s223 + $0x148] sm:$0xff]
                %268 = vst [vmem:[%s224 + $0xa8] sm:$0xff] %v267
                %v269 = vld [vmem:[%s223 + $0x160] sm:$0xff]
                %270 = vst [vmem:[%s224 + $0xb0] sm:$0xff] %v269
                %v271 = vld [vmem:[%s223 + $0x168] sm:$0xff]
                %272 = vst [vmem:[%s224 + $0xb8] sm:$0xff] %v271
                %v273 = vld [vmem:[%s223 + $0x180] sm:$0xff]
                %274 = vst [vmem:[%s224 + $0xc0] sm:$0xff] %v273
                %v275 = vld [vmem:[%s223 + $0x188] sm:$0xff]
                %276 = vst [vmem:[%s224 + $0xc8] sm:$0xff] %v275
                %v277 = vld [vmem:[%s223 + $0x1a0] sm:$0xff]
                %278 = vst [vmem:[%s224 + $0xd0] sm:$0xff] %v277
                %v279 = vld [vmem:[%s223 + $0x1a8] sm:$0xff]
                %280 = vst [vmem:[%s224 + $0xd8] sm:$0xff] %v279
                %v281 = vld [vmem:[%s223 + $0x1c0] sm:$0xff]
                %282 = vst [vmem:[%s224 + $0xe0] sm:$0xff] %v281
                %v283 = vld [vmem:[%s223 + $0x1c8] sm:$0xff]
                %284 = vst [vmem:[%s224 + $0xe8] sm:$0xff] %v283
                %v285 = vld [vmem:[%s223 + $0x1e0] sm:$0xff]
                %286 = vst [vmem:[%s224 + $0xf0] sm:$0xff] %v285
                %v287 = vld [vmem:[%s223 + $0x1e8] sm:$0xff]
                %288 = vst [vmem:[%s224 + $0xf8] sm:$0xff] %v287
              $region53: #{conv3d_bn_forward.3} parent=47 // loop_footer
                %s222 = sadd.s32 1, %s218
              $region54: #{conv3d_bn_forward.3} parent=47 // loop_footer_branch
                %217 = sbr.rel target = $region50
              $region55: #{conv3d_bn_forward.3} parent=47 // loop_exit
                _
            $region48: #{conv3d_bn_forward.3} parent=43 // pred_fallthru
              _
            // Predicated region
            $region56: #{conv3d_bn_forward.3} parent=43 // pred_check
              _
            $region57: #{conv3d_bn_forward.3} parent=43 // pred_check_branch
              %290 = sbr.rel target = $region59
            $region58: #{conv3d_bn_forward.3} parent=43 // pred_region
              _
            $region59: #{conv3d_bn_forward.3} parent=43 // pred_fallthru
              _
          $region44: #{conv3d_bn_forward.3} parent=39 // pred_fallthru
            _
          %291 = vnop
        $region40: #{conv3d_bn_forward.3} parent=35 // pred_fallthru
          _
      $region36: #{conv3d_bn_forward.3} parent=5 // pred_fallthru
        _
      %p292 = scmp.le.s32.totalorder 1, %s12
      %p293 = scmp.lt.s32.totalorder %s12, 3
      %p294 = pnand %p292, %p293
      %p295 = pneg %p294
      // Predicated region
      $region60: #{conv3d_bn_forward.3} parent=5 // pred_check
        _
      $region61: #{conv3d_bn_forward.3} parent=5 // pred_check_branch
        %297 = sbr.rel (%p294) target = $region63
      $region62: #{conv3d_bn_forward.3} parent=5 // pred_region
        %s298 = ssub.s32 %s12, 1
        %s299 = sand.u32 %s130, 1
        %s300 = sand.u32 %s130, 1
        %s301 = smul.addr %s300, 256
        %s302 = scalar_lea.vmem [#allocation2], %s301
        // Predicated region
        $region64: #{conv3d_bn_forward.3} parent=62 // pred_check
          %p303 = pneg %p143
        $region65: #{conv3d_bn_forward.3} parent=62 // pred_check_branch
          %305 = sbr.rel (%p303) target = $region67
        $region66: #{conv3d_bn_forward.3} parent=62 // pred_region
          _
        $region67: #{conv3d_bn_forward.3} parent=62 // pred_fallthru
          _
        %p306 = pneg %p33
        %p307 = pneg %p30
        %p308 = pneg %p54
        %p309 = pneg %p51
        %p310 = pneg %p75
        %p311 = pneg %p72
        %p312 = pneg %p96
        %p313 = pneg %p93
        %p314 = pneg %p117
        %p315 = pneg %p114
        %s316 = sand.u32 %s130, 1
        %s317 = sand.u32 %s130, 1
        %s318 = smul.addr %s317, 256
        %s319 = scalar_lea.vmem [#allocation2], %s318
        %p320 = pneg %p143
        %p321 = pneg %p140
        %p322 = pneg %p169
        %p323 = pneg %p166
        %s324 = smul.u32 4, %s17
        %p325 = scmp.lt.s32.totalorder %s324, 7
        %s326 = scalar_select %p325, %s324, 7
        %s327 = smul.addr %s326, 8
        %s328 = scalar_lea.vmem %s6, %s327
        %s329 = smul.u32 4, %s17
        %s330 = smul.u32 4, %s17
        %p331 = scmp.lt.s32.totalorder %s330, 7
        %s332 = scalar_select %p331, %s330, 7
        %s333 = smul.addr %s332, 8
        %s334 = scalar_lea.vmem %s6, %s333
        %s335 = smul.u32 4, %s17
        %v337 = vld [vmem:[%s0] sm:$0xff]
        %v338 = vld [vmem:[%s0 + $0x8] sm:$0xff]
        %vm339 = vcmask 7168
        %v340 = vsel %vm339, %v337, 0.0
        %v341 = vsel %vm339, %v338, 0.0
        %v342 = vadd.f32 %v340, %v341
        %v343 = vmul.f32 %v342, 0.0009765625
        %v344 = vld [vmem:[%s1] sm:$0xff]
        %v345 = vld [vmem:[%s1 + $0x8] sm:$0xff]
        %v346 = vsel %vm339, %v344, 0.0
        %v347 = vsel %vm339, %v345, 0.0
        %v348 = vadd.f32 %v346, %v347
        %v349 = vmul.f32 %v348, 0.0009765625
        %v350 = vmul.f32 %v343, %v343
        %v351 = vsub.f32 %v349, %v350
        %v352 = vld [vmem:[%s2] sm:$0xff]
        %v353 = vadd.f32 %v351, 0.001
        %v354 = vrsqrt.pop %v353
        %v355 = vmul.f32 %v352, %v354
        %v356 = vld [vmem:[%s3] sm:$0xff]
        %v357 = vmul.f32 %v343, %v355
        %v358 = vsub.f32 %v356, %v357
        %v359 = vld [vmem:[%s4] sm:$0xf]
        %v360 = vld [vmem:[%s302] sm:$0xff]
        %v361 = vld [vmem:[%s302 + $0x8] sm:$0xff]
        %v362 = vld [vmem:[%s302 + $0x10] sm:$0xff]
        %v363 = vld [vmem:[%s302 + $0x18] sm:$0xff]
        %v364 = vld [vmem:[%s302 + $0x20] sm:$0xff]
        %v365 = vld [vmem:[%s302 + $0x28] sm:$0xff]
        %v366 = vld [vmem:[%s302 + $0x30] sm:$0xff]
        %v367 = vld [vmem:[%s302 + $0x38] sm:$0xff]
        %v368 = vld [vmem:[%s302 + $0x40] sm:$0xff]
        %v369 = vld [vmem:[%s302 + $0x48] sm:$0xff]
        %v370 = vld [vmem:[%s302 + $0x50] sm:$0xff]
        %v371 = vld [vmem:[%s302 + $0x58] sm:$0xff]
        %v372 = vld [vmem:[%s302 + $0x60] sm:$0xff]
        %v373 = vld [vmem:[%s302 + $0x68] sm:$0xff]
        %v374 = vld [vmem:[%s302 + $0x70] sm:$0xff]
        %v375 = vld [vmem:[%s302 + $0x78] sm:$0xff]
        %v376 = vld [vmem:[%s302 + $0x80] sm:$0xff]
        %v377 = vld [vmem:[%s302 + $0x88] sm:$0xff]
        %v378 = vld [vmem:[%s302 + $0x90] sm:$0xff]
        %v379 = vld [vmem:[%s302 + $0x98] sm:$0xff]
        %v380 = vld [vmem:[%s302 + $0xa0] sm:$0xff]
        %v381 = vld [vmem:[%s302 + $0xa8] sm:$0xff]
        %v382 = vld [vmem:[%s302 + $0xb0] sm:$0xff]
        %v383 = vld [vmem:[%s302 + $0xb8] sm:$0xff]
        %v384 = vld [vmem:[%s302 + $0xc0] sm:$0xff]
        %v385 = vld [vmem:[%s302 + $0xc8] sm:$0xff]
        %v386 = vld [vmem:[%s302 + $0xd0] sm:$0xff]
        %v387 = vld [vmem:[%s302 + $0xd8] sm:$0xff]
        %v388 = vld [vmem:[%s302 + $0xe0] sm:$0xff]
        %v389 = vld [vmem:[%s302 + $0xe8] sm:$0xff]
        %v390 = vld [vmem:[%s302 + $0xf0] sm:$0xff]
        %v391 = vld [vmem:[%s302 + $0xf8] sm:$0xff]
        %v424 = vunpack.c.l.b16 %v360
        %v425 = vunpack.c.h.b16 %v360
        %v426 = vunpack.c.l.b16 %v361
        %v427 = vunpack.c.h.b16 %v361
        %v428 = vunpack.c.l.b16 %v362
        %v429 = vunpack.c.h.b16 %v362
        %v430 = vunpack.c.l.b16 %v363
        %v431 = vunpack.c.h.b16 %v363
        %v432 = vunpack.c.l.b16 %v364
        %v433 = vunpack.c.h.b16 %v364
        %v434 = vunpack.c.l.b16 %v365
        %v435 = vunpack.c.h.b16 %v365
        %v436 = vunpack.c.l.b16 %v366
        %v437 = vunpack.c.h.b16 %v366
        %v438 = vunpack.c.l.b16 %v367
        %v439 = vunpack.c.h.b16 %v367
        %v440 = vunpack.c.l.b16 %v368
        %v441 = vunpack.c.h.b16 %v368
        %v442 = vunpack.c.l.b16 %v369
        %v443 = vunpack.c.h.b16 %v369
        %v444 = vunpack.c.l.b16 %v370
        %v445 = vunpack.c.h.b16 %v370
        %v446 = vunpack.c.l.b16 %v371
        %v447 = vunpack.c.h.b16 %v371
        %v448 = vunpack.c.l.b16 %v372
        %v449 = vunpack.c.h.b16 %v372
        %v450 = vunpack.c.l.b16 %v373
        %v451 = vunpack.c.h.b16 %v373
        %v452 = vunpack.c.l.b16 %v374
        %v453 = vunpack.c.h.b16 %v374
        %v454 = vunpack.c.l.b16 %v375
        %v455 = vunpack.c.h.b16 %v375
        %v456 = vunpack.c.l.b16 %v376
        %v457 = vunpack.c.h.b16 %v376
        %v458 = vunpack.c.l.b16 %v377
        %v459 = vunpack.c.h.b16 %v377
        %v460 = vunpack.c.l.b16 %v378
        %v461 = vunpack.c.h.b16 %v378
        %v462 = vunpack.c.l.b16 %v379
        %v463 = vunpack.c.h.b16 %v379
        %v464 = vunpack.c.l.b16 %v380
        %v465 = vunpack.c.h.b16 %v380
        %v466 = vunpack.c.l.b16 %v381
        %v467 = vunpack.c.h.b16 %v381
        %v468 = vunpack.c.l.b16 %v382
        %v469 = vunpack.c.h.b16 %v382
        %v470 = vunpack.c.l.b16 %v383
        %v471 = vunpack.c.h.b16 %v383
        %v472 = vunpack.c.l.b16 %v384
        %v473 = vunpack.c.h.b16 %v384
        %v474 = vunpack.c.l.b16 %v385
        %v475 = vunpack.c.h.b16 %v385
        %v476 = vunpack.c.l.b16 %v386
        %v477 = vunpack.c.h.b16 %v386
        %v478 = vunpack.c.l.b16 %v387
        %v479 = vunpack.c.h.b16 %v387
        %v480 = vunpack.c.l.b16 %v388
        %v481 = vunpack.c.h.b16 %v388
        %v482 = vunpack.c.l.b16 %v389
        %v483 = vunpack.c.h.b16 %v389
        %v484 = vunpack.c.l.b16 %v390
        %v485 = vunpack.c.h.b16 %v390
        %v486 = vunpack.c.l.b16 %v391
        %v487 = vunpack.c.h.b16 %v391
        %v488 = vpack.c.b16 %v428, %v424
        %v489 = vpack.c.b16 %v429, %v425
        %v490 = vpack.c.b16 %v430, %v426
        %v491 = vpack.c.b16 %v431, %v427
        %v492 = vpack.c.b16 %v436, %v432
        %v493 = vpack.c.b16 %v437, %v433
        %v494 = vpack.c.b16 %v438, %v434
        %v495 = vpack.c.b16 %v439, %v435
        %v496 = vpack.c.b16 %v444, %v440
        %v497 = vpack.c.b16 %v445, %v441
        %v498 = vpack.c.b16 %v446, %v442
        %v499 = vpack.c.b16 %v447, %v443
        %v500 = vpack.c.b16 %v452, %v448
        %v501 = vpack.c.b16 %v453, %v449
        %v502 = vpack.c.b16 %v454, %v450
        %v503 = vpack.c.b16 %v455, %v451
        %v504 = vpack.c.b16 %v460, %v456
        %v505 = vpack.c.b16 %v461, %v457
        %v506 = vpack.c.b16 %v462, %v458
        %v507 = vpack.c.b16 %v463, %v459
        %v508 = vpack.c.b16 %v468, %v464
        %v509 = vpack.c.b16 %v469, %v465
        %v510 = vpack.c.b16 %v470, %v466
        %v511 = vpack.c.b16 %v471, %v467
        %v512 = vpack.c.b16 %v476, %v472
        %v513 = vpack.c.b16 %v477, %v473
        %v514 = vpack.c.b16 %v478, %v474
        %v515 = vpack.c.b16 %v479, %v475
        %v516 = vpack.c.b16 %v484, %v480
        %v517 = vpack.c.b16 %v485, %v481
        %v518 = vpack.c.b16 %v486, %v482
        %v519 = vpack.c.b16 %v487, %v483
        %552 = vmatprep.subr.bf16.mxu0 %v517
        %553 = vmatpush1.bf16.msra.mxu0 %v516
        %554 = vmatprep.subr.bf16.mxu0 %v513
        %555 = vmatpush1.bf16.msra.mxu0 %v512
        %556 = vmatprep.subr.bf16.mxu0 %v509
        %557 = vmatpush1.bf16.msra.mxu0 %v508
        %558 = vmatprep.subr.bf16.mxu0 %v505
        %559 = vmatpush1.bf16.msra.mxu0 %v504
        %560 = vmatprep.subr.bf16.mxu0 %v501
        %561 = vmatpush1.bf16.msra.mxu0 %v500
        %562 = vmatprep.subr.bf16.mxu0 %v497
        %563 = vmatpush1.bf16.msra.mxu0 %v496
        %564 = vmatprep.subr.bf16.mxu0 %v493
        %565 = vmatpush1.bf16.msra.mxu0 %v492
        %566 = vmatprep.subr.bf16.mxu0 %v489
        %567 = vmatpush1.bf16.msra.mxu0 %v488
        %568 = vmatprep.subr.bf16.mxu0 0
        %569 = vmatpush2.bf16.msra.mxu0 0
        %570 = vmatprep.subr.bf16.mxu0 0
        %571 = vmatpush2.bf16.msra.mxu0 0
        %572 = vmatprep.subr.bf16.mxu0 0
        %573 = vmatpush2.bf16.msra.mxu0 0
        %574 = vmatprep.subr.bf16.mxu0 0
        %575 = vmatpush2.bf16.msra.mxu0 0
        %576 = vmatprep.subr.bf16.mxu0 0
        %577 = vmatpush2.bf16.msra.mxu0 0
        %578 = vmatprep.subr.bf16.mxu0 0
        %579 = vmatpush2.bf16.msra.mxu0 0
        %580 = vmatprep.subr.bf16.mxu0 0
        %581 = vmatpush2.bf16.msra.mxu0 0
        %582 = vmatprep.subr.bf16.mxu0 0
        %583 = vmatpush2.bf16.msra.mxu0 0
        %584 = vmatprep.mubr.bf16.mxu0 0
        %585 = vmatmul.mubr.bf16.gmra.mxu0 %v359
        %v586 = vpop.f32.mrf.mxu0
        %v587 = vadd.f32 0.0, %v586
        %v588 = vpop.f32.mrf.mxu0
        %v589 = vadd.f32 0.0, %v588
        %v590 = vpop.f32.mrf.mxu0
        %v591 = vpop.f32.mrf.mxu0
        %592 = vdwg.mxu0
        %593 = vmatprep.subr.bf16.mxu0 %v519
        %594 = vmatpush1.bf16.msra.mxu0 %v518
        %595 = vmatprep.subr.bf16.mxu0 %v515
        %596 = vmatpush1.bf16.msra.mxu0 %v514
        %597 = vmatprep.subr.bf16.mxu0 %v511
        %598 = vmatpush1.bf16.msra.mxu0 %v510
        %599 = vmatprep.subr.bf16.mxu0 %v507
        %600 = vmatpush1.bf16.msra.mxu0 %v506
        %601 = vmatprep.subr.bf16.mxu0 %v503
        %602 = vmatpush1.bf16.msra.mxu0 %v502
        %603 = vmatprep.subr.bf16.mxu0 %v499
        %604 = vmatpush1.bf16.msra.mxu0 %v498
        %605 = vmatprep.subr.bf16.mxu0 %v495
        %606 = vmatpush1.bf16.msra.mxu0 %v494
        %607 = vmatprep.subr.bf16.mxu0 %v491
        %608 = vmatpush1.bf16.msra.mxu0 %v490
        %609 = vmatprep.subr.bf16.mxu0 0
        %610 = vmatpush2.bf16.msra.mxu0 0
        %611 = vmatprep.subr.bf16.mxu0 0
        %612 = vmatpush2.bf16.msra.mxu0 0
        %613 = vmatprep.subr.bf16.mxu0 0
        %614 = vmatpush2.bf16.msra.mxu0 0
        %615 = vmatprep.subr.bf16.mxu0 0
        %616 = vmatpush2.bf16.msra.mxu0 0
        %617 = vmatprep.subr.bf16.mxu0 0
        %618 = vmatpush2.bf16.msra.mxu0 0
        %619 = vmatprep.subr.bf16.mxu0 0
        %620 = vmatpush2.bf16.msra.mxu0 0
        %621 = vmatprep.subr.bf16.mxu0 0
        %622 = vmatpush2.bf16.msra.mxu0 0
        %623 = vmatprep.subr.bf16.mxu0 0
        %624 = vmatpush2.bf16.msra.mxu0 0
        %625 = vmatprep.mubr.bf16.mxu0 0
        %626 = vmatmul.mubr.bf16.gmra.mxu0 %v359
        %v627 = vpop.f32.mrf.mxu0
        %v628 = vadd.f32 0.0, %v627
        %v629 = vpop.f32.mrf.mxu0
        %v630 = vadd.f32 0.0, %v629
        %v631 = vpop.f32.mrf.mxu0
        %v632 = vpop.f32.mrf.mxu0
        %633 = vdwg.mxu0
        %635 = vset.pattern.permute.xlu0 0
        %636 = vperm.xlu0 %635, %v355
        %v637 = vpop.permute.xlu0 %636
        %v639 = vmul.f32 %v587, %v637
        %v640 = vmul.f32 %v589, %v637
        %v641 = vmul.f32 %v628, %v637
        %v642 = vmul.f32 %v630, %v637
        %644 = vset.pattern.permute.xlu0 0
        %645 = vperm.xlu0 %644, %v358
        %v646 = vpop.permute.xlu0 %645
        %v648 = vadd.f32 %v639, %v646
        %v649 = vadd.f32 %v640, %v646
        %v650 = vadd.f32 %v641, %v646
        %v651 = vadd.f32 %v642, %v646
        %652 = vst [vmem:[%s334] sm:$0xff] %v648
        %653 = vst [vmem:[%s334 + $0x8] sm:$0xff] %v649
        %654 = vst [vmem:[%s334 + $0x10] sm:$0xff] %v650
        %655 = vst [vmem:[%s334 + $0x18] sm:$0xff] %v651
        %s656 = smul.u32 4, %s17
        %p657 = scmp.lt.s32.totalorder %s656, 7
        %s658 = scalar_select %p657, %s656, 7
        %s659 = smul.addr %s658, 8
        %s660 = scalar_lea.vmem %s6, %s659
        // Predicated region
        $region68: #{conv3d_bn_forward.3} parent=62 // pred_check
          %p661 = pneg %p166
        $region69: #{conv3d_bn_forward.3} parent=62 // pred_check_branch
          %663 = sbr.rel (%p661) target = $region71
        $region70: #{conv3d_bn_forward.3} parent=62 // pred_region
          %s664 = smul.u32 4, %s17
        $region71: #{conv3d_bn_forward.3} parent=62 // pred_fallthru
          _
      $region63: #{conv3d_bn_forward.3} parent=5 // pred_fallthru
        _
      %p665 = scmp.le.s32.totalorder 2, %s12
      // Predicated region
      $region72: #{conv3d_bn_forward.3} parent=5 // pred_check
        %p666 = pneg %p665
      $region73: #{conv3d_bn_forward.3} parent=5 // pred_check_branch
        %668 = sbr.rel (%p666) target = $region75
      $region74: #{conv3d_bn_forward.3} parent=5 // pred_region
        %s669 = ssub.s32 %s12, 2
        // Predicated region
        $region76: #{conv3d_bn_forward.3} parent=74 // pred_check
          %p670 = pneg %p172
        $region77: #{conv3d_bn_forward.3} parent=74 // pred_check_branch
          %672 = sbr.rel (%p670) target = $region79
        $region78: #{conv3d_bn_forward.3} parent=74 // pred_region
          %s673 = smul.u32 4, %s18
          %p674 = scmp.lt.s32.totalorder %s673, 7
          %s675 = scalar_select %p674, %s673, 7
          %s676 = smul.addr %s675, 8
          %s677 = scalar_lea.vmem %s6, %s676
        $region79: #{conv3d_bn_forward.3} parent=74 // pred_fallthru
          _
      $region75: #{conv3d_bn_forward.3} parent=5 // pred_fallthru
        _
    $region6: #{conv3d_bn_forward.3} parent=1 // loop_footer
      %s16 = sadd.s32 1, %s12
    $region7: #{conv3d_bn_forward.3} parent=1 // loop_footer_branch
      %11 = sbr.rel target = $region3
    $region8: #{conv3d_bn_forward.3} parent=1 // loop_exit
      _

// kernel: conv3d_bn_forward.2
$region0: #{conv3d_bn_forward.2}
  #allocation0 [shape = 'u32[]', space=smem, size = 0x4, offset = 0x4, fixed_abs, tag = 'smem constant byte address 0x4 - core index']
  #allocation1 [shape = 'u32[144,128]{1,0:T(1,128)}', space=vmem, size = 0x12000, scoped, tag = 'internal scratch']
  %s0 = inlined_call_operand.vmem [shape: bf16[8,128], index: 0, kind: input, shape index: {}]
  %s1 = inlined_call_operand.vmem [shape: bf16[128,1024], index: 1, kind: input, shape index: {}]
  %s2 = inlined_call_operand.vmem [shape: f32[2,8,1], index: 2, kind: output, shape index: {0}]
  %s3 = inlined_call_operand.vmem [shape: f32[2,8,1], index: 3, kind: output, shape index: {1}]
  %4 = xla_tuple %s2, %s3
  %s5 = sld [smem:[#allocation0]]
  $region72: #{conv3d_bn_forward.2} parent=0
    _
  %s7 = ssub.s32 1, %s5
  %s8 = scalar_select 0, %s7, %s5
  $region1: #{conv3d_bn_forward.2} parent=0
    #allocation2 [shape = 'u8[262144]{0}', space=vmem, size = 0x40000, scoped, tag = 'input window, operand 1']
    loop: start=0, step=1, limit=4
    $region2: #{conv3d_bn_forward.2} parent=1 // loop_pre_header
      _
    $region3: #{conv3d_bn_forward.2} parent=1 // loop_header
      %s10 = sphi 0, %s14
      %p11 = scmp.ge.s32.totalorder %s10, 4
      %s18 = sphi 0, %s18
      %s20 = sphi 0, %s18
      %s21 = sphi 0, %s20
      %s35 = sphi 0, %s21
      %s41 = sphi 0, %s43
      %s44 = sphi 0, %s41
      %s45 = sphi 0, %s44
      %s61 = sphi 0, %s45
      %s67 = sphi 0, %s69
      %s70 = sphi 0, %s67
      %s71 = sphi 0, %s70
      %s87 = sphi 0, %s71
      %s93 = sphi 0, %s95
      %s96 = sphi 0, %s93
      %s97 = sphi 0, %s96
      %s113 = sphi 0, %s97
    $region4: #{conv3d_bn_forward.2} parent=1 // loop_header_branch
      %13 = sbr.rel (%p11) target = $region8
    $region5: #{conv3d_bn_forward.2} parent=1 // loop_body
      %s15 = ssub.s32 %s10, 1
      %s16 = ssub.s32 %s10, 2
      %s17 = sadd.s32 %s10, 1
      %s19 = sadd.s32 %s18, 1
      %p22 = scmp.eq.s32.totalorder %s10, 1
      %p23 = scmp.ne.s32.totalorder %s18, %s20
      %p24 = scmp.eq.s32.totalorder %s10, 0
      %p25 = por %p23, %p24
      %p26 = scmp.ne.s32.totalorder %s18, %s20
      %p27 = scmp.eq.s32.totalorder %s15, 1
      %p28 = por %p26, %p27
      %p29 = scmp.ne.s32.totalorder %s20, %s21
      %p30 = scmp.eq.s32.totalorder %s15, 0
      %p31 = por %p29, %p30
      %p32 = scmp.ne.s32.totalorder %s20, %s21
      %p33 = scmp.eq.s32.totalorder %s16, 1
      %p34 = por %p32, %p33
      %p36 = scmp.ne.s32.totalorder %s21, %s35
      %p37 = scmp.eq.s32.totalorder %s16, 0
      %p38 = por %p36, %p37
      %s39 = ssub.s32 %s10, %s17
      %p40 = scmp.eq.s32.totalorder %s39, 0
      %s42 = sadd.s32 %s41, 1
      %s43 = scalar_select %p40, %s41, %s42
      %p46 = pneg %p40
      %p47 = scmp.eq.s32.totalorder %s10, 1
      %p48 = por %p46, %p47
      %p49 = scmp.ne.s32.totalorder %s41, %s44
      %p50 = scmp.eq.s32.totalorder %s10, 0
      %p51 = por %p49, %p50
      %p52 = scmp.ne.s32.totalorder %s41, %s44
      %p53 = scmp.eq.s32.totalorder %s15, 1
      %p54 = por %p52, %p53
      %p55 = scmp.ne.s32.totalorder %s44, %s45
      %p56 = scmp.eq.s32.totalorder %s15, 0
      %p57 = por %p55, %p56
      %p58 = scmp.ne.s32.totalorder %s44, %s45
      %p59 = scmp.eq.s32.totalorder %s16, 1
      %p60 = por %p58, %p59
      %p62 = scmp.ne.s32.totalorder %s45, %s61
      %p63 = scmp.eq.s32.totalorder %s16, 0
      %p64 = por %p62, %p63
      %s65 = ssub.s32 %s10, %s17
      %p66 = scmp.eq.s32.totalorder %s65, 0
      %s68 = sadd.s32 %s67, 1
      %s69 = scalar_select %p66, %s67, %s68
      %p72 = pneg %p66
      %p73 = scmp.eq.s32.totalorder %s10, 1
      %p74 = por %p72, %p73
      %p75 = scmp.ne.s32.totalorder %s67, %s70
      %p76 = scmp.eq.s32.totalorder %s10, 0
      %p77 = por %p75, %p76
      %p78 = scmp.ne.s32.totalorder %s67, %s70
      %p79 = scmp.eq.s32.totalorder %s15, 1
      %p80 = por %p78, %p79
      %p81 = scmp.ne.s32.totalorder %s70, %s71
      %p82 = scmp.eq.s32.totalorder %s15, 0
      %p83 = por %p81, %p82
      %p84 = scmp.ne.s32.totalorder %s70, %s71
      %p85 = scmp.eq.s32.totalorder %s16, 1
      %p86 = por %p84, %p85
      %p88 = scmp.ne.s32.totalorder %s71, %s87
      %p89 = scmp.eq.s32.totalorder %s16, 0
      %p90 = por %p88, %p89
      %s91 = ssub.s32 %s10, %s17
      %p92 = scmp.eq.s32.totalorder %s91, 0
      %s94 = sadd.s32 %s93, 1
      %s95 = scalar_select %p92, %s93, %s94
      %p98 = pneg %p92
      %p99 = scmp.eq.s32.totalorder %s10, 1
      %p100 = por %p98, %p99
      %p101 = scmp.ne.s32.totalorder %s93, %s96
      %p102 = scmp.eq.s32.totalorder %s10, 0
      %p103 = por %p101, %p102
      %p104 = scmp.ne.s32.totalorder %s93, %s96
      %p105 = scmp.eq.s32.totalorder %s15, 1
      %p106 = por %p104, %p105
      %p107 = scmp.ne.s32.totalorder %s96, %s97
      %p108 = scmp.eq.s32.totalorder %s15, 0
      %p109 = por %p107, %p108
      %p110 = scmp.ne.s32.totalorder %s96, %s97
      %p111 = scmp.eq.s32.totalorder %s16, 1
      %p112 = por %p110, %p111
      %p114 = scmp.ne.s32.totalorder %s97, %s113
      %p115 = scmp.eq.s32.totalorder %s16, 0
      %p116 = por %p114, %p115
      %p117 = scmp.le.s32.totalorder 1, %s10
      %p118 = scmp.lt.s32.totalorder %s10, 3
      %p119 = pnand %p117, %p118
      %p120 = pneg %p119
      // Predicated region
      $region9: #{conv3d_bn_forward.2} parent=5 // pred_check
        _
      $region10: #{conv3d_bn_forward.2} parent=5 // pred_check_branch
        %122 = sbr.rel (%p119) target = $region12
      $region11: #{conv3d_bn_forward.2} parent=5 // pred_region
        %s123 = ssub.s32 %s10, 1
        // Predicated region
        $region13: #{conv3d_bn_forward.2} parent=11 // pred_check
          %p124 = pneg %p31
        $region14: #{conv3d_bn_forward.2} parent=11 // pred_check_branch
          %126 = sbr.rel (%p124) target = $region16
        $region15: #{conv3d_bn_forward.2} parent=11 // pred_region
          _
        $region16: #{conv3d_bn_forward.2} parent=11 // pred_fallthru
          _
      $region12: #{conv3d_bn_forward.2} parent=5 // pred_fallthru
        _
      %p127 = scmp.lt.s32.totalorder %s10, 2
      // Predicated region
      $region17: #{conv3d_bn_forward.2} parent=5 // pred_check
        %p128 = pneg %p127
      $region18: #{conv3d_bn_forward.2} parent=5 // pred_check_branch
        %130 = sbr.rel (%p128) target = $region20
      $region19: #{conv3d_bn_forward.2} parent=5 // pred_region
        // Predicated region
        $region21: #{conv3d_bn_forward.2} parent=19 // pred_check
          %p131 = pneg %p51
        $region22: #{conv3d_bn_forward.2} parent=19 // pred_check_branch
          %133 = sbr.rel (%p131) target = $region24
        $region23: #{conv3d_bn_forward.2} parent=19 // pred_region
          %s134 = sand.u32 %s41, 1
          %s135 = sand.u32 %s41, 1
          %s136 = smul.addr %s135, 256
          %s137 = scalar_lea.vmem [#allocation2], %s136
          %s138 = smul.u32 4, %s10
          %s139 = smul.addr %s138, 4
          %s140 = scalar_lea.vmem %s1, %s139
          // Predicated region
          $region25: #{conv3d_bn_forward.2} parent=23 // pred_check
            _
          $region26: #{conv3d_bn_forward.2} parent=23 // pred_check_branch
            %142 = sbr.rel (0) target = $region28
          $region27: #{conv3d_bn_forward.2} parent=23 // pred_region
            // Predicated region
            $region29: #{conv3d_bn_forward.2} parent=27 // pred_check
              _
            $region30: #{conv3d_bn_forward.2} parent=27 // pred_check_branch
              %144 = sbr.rel (0) target = $region32
            $region31: #{conv3d_bn_forward.2} parent=27 // pred_region
              loop: start=0, step=1, limit=1
              $region33: #{conv3d_bn_forward.2} parent=31 // loop_pre_header
                _
              $region34: #{conv3d_bn_forward.2} parent=31 // loop_header
                %s146 = sphi 0, %s150
                %p147 = scmp.ge.s32.totalorder %s146, 1
                %s151 = sphi %s140, %s140
                %s152 = sphi %s137, %s137
              $region35: #{conv3d_bn_forward.2} parent=31 // loop_header_branch
                %149 = sbr.rel (%p147) target = $region39
              $region36: #{conv3d_bn_forward.2} parent=31 // loop_body
                %v153 = vld [vmem:[%s151] sm:$0xff]
                %154 = vst [vmem:[%s152] sm:$0xff] %v153
                %v155 = vld [vmem:[%s151 + $0x8] sm:$0xff]
                %156 = vst [vmem:[%s152 + $0x8] sm:$0xff] %v155
                %v157 = vld [vmem:[%s151 + $0x20] sm:$0xff]
                %158 = vst [vmem:[%s152 + $0x10] sm:$0xff] %v157
                %v159 = vld [vmem:[%s151 + $0x28] sm:$0xff]
                %160 = vst [vmem:[%s152 + $0x18] sm:$0xff] %v159
                %v161 = vld [vmem:[%s151 + $0x40] sm:$0xff]
                %162 = vst [vmem:[%s152 + $0x20] sm:$0xff] %v161
                %v163 = vld [vmem:[%s151 + $0x48] sm:$0xff]
                %164 = vst [vmem:[%s152 + $0x28] sm:$0xff] %v163
                %v165 = vld [vmem:[%s151 + $0x60] sm:$0xff]
                %166 = vst [vmem:[%s152 + $0x30] sm:$0xff] %v165
                %v167 = vld [vmem:[%s151 + $0x68] sm:$0xff]
                %168 = vst [vmem:[%s152 + $0x38] sm:$0xff] %v167
                %v169 = vld [vmem:[%s151 + $0x80] sm:$0xff]
                %170 = vst [vmem:[%s152 + $0x40] sm:$0xff] %v169
                %v171 = vld [vmem:[%s151 + $0x88] sm:$0xff]
                %172 = vst [vmem:[%s152 + $0x48] sm:$0xff] %v171
                %v173 = vld [vmem:[%s151 + $0xa0] sm:$0xff]
                %174 = vst [vmem:[%s152 + $0x50] sm:$0xff] %v173
                %v175 = vld [vmem:[%s151 + $0xa8] sm:$0xff]
                %176 = vst [vmem:[%s152 + $0x58] sm:$0xff] %v175
                %v177 = vld [vmem:[%s151 + $0xc0] sm:$0xff]
                %178 = vst [vmem:[%s152 + $0x60] sm:$0xff] %v177
                %v179 = vld [vmem:[%s151 + $0xc8] sm:$0xff]
                %180 = vst [vmem:[%s152 + $0x68] sm:$0xff] %v179
                %v181 = vld [vmem:[%s151 + $0xe0] sm:$0xff]
                %182 = vst [vmem:[%s152 + $0x70] sm:$0xff] %v181
                %v183 = vld [vmem:[%s151 + $0xe8] sm:$0xff]
                %184 = vst [vmem:[%s152 + $0x78] sm:$0xff] %v183
                %v185 = vld [vmem:[%s151 + $0x100] sm:$0xff]
                %186 = vst [vmem:[%s152 + $0x80] sm:$0xff] %v185
                %v187 = vld [vmem:[%s151 + $0x108] sm:$0xff]
                %188 = vst [vmem:[%s152 + $0x88] sm:$0xff] %v187
                %v189 = vld [vmem:[%s151 + $0x120] sm:$0xff]
                %190 = vst [vmem:[%s152 + $0x90] sm:$0xff] %v189
                %v191 = vld [vmem:[%s151 + $0x128] sm:$0xff]
                %192 = vst [vmem:[%s152 + $0x98] sm:$0xff] %v191
                %v193 = vld [vmem:[%s151 + $0x140] sm:$0xff]
                %194 = vst [vmem:[%s152 + $0xa0] sm:$0xff] %v193
                %v195 = vld [vmem:[%s151 + $0x148] sm:$0xff]
                %196 = vst [vmem:[%s152 + $0xa8] sm:$0xff] %v195
                %v197 = vld [vmem:[%s151 + $0x160] sm:$0xff]
                %198 = vst [vmem:[%s152 + $0xb0] sm:$0xff] %v197
                %v199 = vld [vmem:[%s151 + $0x168] sm:$0xff]
                %200 = vst [vmem:[%s152 + $0xb8] sm:$0xff] %v199
                %v201 = vld [vmem:[%s151 + $0x180] sm:$0xff]
                %202 = vst [vmem:[%s152 + $0xc0] sm:$0xff] %v201
                %v203 = vld [vmem:[%s151 + $0x188] sm:$0xff]
                %204 = vst [vmem:[%s152 + $0xc8] sm:$0xff] %v203
                %v205 = vld [vmem:[%s151 + $0x1a0] sm:$0xff]
                %206 = vst [vmem:[%s152 + $0xd0] sm:$0xff] %v205
                %v207 = vld [vmem:[%s151 + $0x1a8] sm:$0xff]
                %208 = vst [vmem:[%s152 + $0xd8] sm:$0xff] %v207
                %v209 = vld [vmem:[%s151 + $0x1c0] sm:$0xff]
                %210 = vst [vmem:[%s152 + $0xe0] sm:$0xff] %v209
                %v211 = vld [vmem:[%s151 + $0x1c8] sm:$0xff]
                %212 = vst [vmem:[%s152 + $0xe8] sm:$0xff] %v211
                %v213 = vld [vmem:[%s151 + $0x1e0] sm:$0xff]
                %214 = vst [vmem:[%s152 + $0xf0] sm:$0xff] %v213
                %v215 = vld [vmem:[%s151 + $0x1e8] sm:$0xff]
                %216 = vst [vmem:[%s152 + $0xf8] sm:$0xff] %v215
              $region37: #{conv3d_bn_forward.2} parent=31 // loop_footer
                %s150 = sadd.s32 1, %s146
              $region38: #{conv3d_bn_forward.2} parent=31 // loop_footer_branch
                %145 = sbr.rel target = $region34
              $region39: #{conv3d_bn_forward.2} parent=31 // loop_exit
                _
            $region32: #{conv3d_bn_forward.2} parent=27 // pred_fallthru
              _
            // Predicated region
            $region40: #{conv3d_bn_forward.2} parent=27 // pred_check
              _
            $region41: #{conv3d_bn_forward.2} parent=27 // pred_check_branch
              %218 = sbr.rel target = $region43
            $region42: #{conv3d_bn_forward.2} parent=27 // pred_region
              _
            $region43: #{conv3d_bn_forward.2} parent=27 // pred_fallthru
              _
          $region28: #{conv3d_bn_forward.2} parent=23 // pred_fallthru
            _
          %219 = vnop
        $region24: #{conv3d_bn_forward.2} parent=19 // pred_fallthru
          _
      $region20: #{conv3d_bn_forward.2} parent=5 // pred_fallthru
        _
      %p220 = scmp.le.s32.totalorder 1, %s10
      %p221 = scmp.lt.s32.totalorder %s10, 3
      %p222 = pnand %p220, %p221
      %p223 = pneg %p222
      // Predicated region
      $region44: #{conv3d_bn_forward.2} parent=5 // pred_check
        _
      $region45: #{conv3d_bn_forward.2} parent=5 // pred_check_branch
        %225 = sbr.rel (%p222) target = $region47
      $region46: #{conv3d_bn_forward.2} parent=5 // pred_region
        %s226 = ssub.s32 %s10, 1
        %s227 = sand.u32 %s44, 1
        %s228 = sand.u32 %s44, 1
        %s229 = smul.addr %s228, 256
        %s230 = scalar_lea.vmem [#allocation2], %s229
        // Predicated region
        $region48: #{conv3d_bn_forward.2} parent=46 // pred_check
          %p231 = pneg %p57
        $region49: #{conv3d_bn_forward.2} parent=46 // pred_check_branch
          %233 = sbr.rel (%p231) target = $region51
        $region50: #{conv3d_bn_forward.2} parent=46 // pred_region
          _
        $region51: #{conv3d_bn_forward.2} parent=46 // pred_fallthru
          _
        %p234 = pneg %p31
        %p235 = pneg %p28
        %s236 = sand.u32 %s44, 1
        %s237 = sand.u32 %s44, 1
        %s238 = smul.addr %s237, 256
        %s239 = scalar_lea.vmem [#allocation2], %s238
        %p240 = pneg %p57
        %p241 = pneg %p54
        %p242 = pneg %p83
        %p243 = pneg %p80
        %p244 = scmp.lt.s32.totalorder %s15, 1
        %s245 = scalar_select %p244, %s15, 1
        %s246 = smul.addr %s245, 8
        %s247 = scalar_lea.vmem %s2, %s246
        %p248 = pneg %p109
        %p249 = pneg %p106
        %p250 = scmp.lt.s32.totalorder %s15, 1
        %s251 = scalar_select %p250, %s15, 1
        %s252 = smul.addr %s251, 8
        %s253 = scalar_lea.vmem %s3, %s252
        %s254 = smul.u32 4, %s15
        %p255 = scmp.lt.s32.totalorder %s15, 1
        %s256 = scalar_select %p255, %s15, 1
        %s257 = smul.addr %s256, 8
        %s258 = scalar_lea.vmem %s2, %s257
        %p259 = scmp.lt.s32.totalorder %s15, 1
        %s260 = scalar_select %p259, %s15, 1
        %s261 = smul.addr %s260, 8
        %s262 = scalar_lea.vmem %s3, %s261
        %v264 = vld [vmem:[%s0] sm:$0xf]
        %v265 = vld [vmem:[%s230] sm:$0xff]
        %v266 = vld [vmem:[%s230 + $0x8] sm:$0xff]
        %v267 = vld [vmem:[%s230 + $0x10] sm:$0xff]
        %v268 = vld [vmem:[%s230 + $0x18] sm:$0xff]
        %v269 = vld [vmem:[%s230 + $0x20] sm:$0xff]
        %v270 = vld [vmem:[%s230 + $0x28] sm:$0xff]
        %v271 = vld [vmem:[%s230 + $0x30] sm:$0xff]
        %v272 = vld [vmem:[%s230 + $0x38] sm:$0xff]
        %v273 = vld [vmem:[%s230 + $0x40] sm:$0xff]
        %v274 = vld [vmem:[%s230 + $0x48] sm:$0xff]
        %v275 = vld [vmem:[%s230 + $0x50] sm:$0xff]
        %v276 = vld [vmem:[%s230 + $0x58] sm:$0xff]
        %v277 = vld [vmem:[%s230 + $0x60] sm:$0xff]
        %v278 = vld [vmem:[%s230 + $0x68] sm:$0xff]
        %v279 = vld [vmem:[%s230 + $0x70] sm:$0xff]
        %v280 = vld [vmem:[%s230 + $0x78] sm:$0xff]
        %v281 = vld [vmem:[%s230 + $0x80] sm:$0xff]
        %v282 = vld [vmem:[%s230 + $0x88] sm:$0xff]
        %v283 = vld [vmem:[%s230 + $0x90] sm:$0xff]
        %v284 = vld [vmem:[%s230 + $0x98] sm:$0xff]
        %v285 = vld [vmem:[%s230 + $0xa0] sm:$0xff]
        %v286 = vld [vmem:[%s230 + $0xa8] sm:$0xff]
        %v287 = vld [vmem:[%s230 + $0xb0] sm:$0xff]
        %v288 = vld [vmem:[%s230 + $0xb8] sm:$0xff]
        %v289 = vld [vmem:[%s230 + $0xc0] sm:$0xff]
        %v290 = vld [vmem:[%s230 + $0xc8] sm:$0xff]
        %v291 = vld [vmem:[%s230 + $0xd0] sm:$0xff]
        %v292 = vld [vmem:[%s230 + $0xd8] sm:$0xff]
        %v293 = vld [vmem:[%s230 + $0xe0] sm:$0xff]
        %v294 = vld [vmem:[%s230 + $0xe8] sm:$0xff]
        %v295 = vld [vmem:[%s230 + $0xf0] sm:$0xff]
        %v296 = vld [vmem:[%s230 + $0xf8] sm:$0xff]
        %v329 = vunpack.c.l.b16 %v265
        %v330 = vunpack.c.h.b16 %v265
        %v331 = vunpack.c.l.b16 %v266
        %v332 = vunpack.c.h.b16 %v266
        %v333 = vunpack.c.l.b16 %v267
        %v334 = vunpack.c.h.b16 %v267
        %v335 = vunpack.c.l.b16 %v268
        %v336 = vunpack.c.h.b16 %v268
        %v337 = vunpack.c.l.b16 %v269
        %v338 = vunpack.c.h.b16 %v269
        %v339 = vunpack.c.l.b16 %v270
        %v340 = vunpack.c.h.b16 %v270
        %v341 = vunpack.c.l.b16 %v271
        %v342 = vunpack.c.h.b16 %v271
        %v343 = vunpack.c.l.b16 %v272
        %v344 = vunpack.c.h.b16 %v272
        %v345 = vunpack.c.l.b16 %v273
        %v346 = vunpack.c.h.b16 %v273
        %v347 = vunpack.c.l.b16 %v274
        %v348 = vunpack.c.h.b16 %v274
        %v349 = vunpack.c.l.b16 %v275
        %v350 = vunpack.c.h.b16 %v275
        %v351 = vunpack.c.l.b16 %v276
        %v352 = vunpack.c.h.b16 %v276
        %v353 = vunpack.c.l.b16 %v277
        %v354 = vunpack.c.h.b16 %v277
        %v355 = vunpack.c.l.b16 %v278
        %v356 = vunpack.c.h.b16 %v278
        %v357 = vunpack.c.l.b16 %v279
        %v358 = vunpack.c.h.b16 %v279
        %v359 = vunpack.c.l.b16 %v280
        %v360 = vunpack.c.h.b16 %v280
        %v361 = vunpack.c.l.b16 %v281
        %v362 = vunpack.c.h.b16 %v281
        %v363 = vunpack.c.l.b16 %v282
        %v364 = vunpack.c.h.b16 %v282
        %v365 = vunpack.c.l.b16 %v283
        %v366 = vunpack.c.h.b16 %v283
        %v367 = vunpack.c.l.b16 %v284
        %v368 = vunpack.c.h.b16 %v284
        %v369 = vunpack.c.l.b16 %v285
        %v370 = vunpack.c.h.b16 %v285
        %v371 = vunpack.c.l.b16 %v286
        %v372 = vunpack.c.h.b16 %v286
        %v373 = vunpack.c.l.b16 %v287
        %v374 = vunpack.c.h.b16 %v287
        %v375 = vunpack.c.l.b16 %v288
        %v376 = vunpack.c.h.b16 %v288
        %v377 = vunpack.c.l.b16 %v289
        %v378 = vunpack.c.h.b16 %v289
        %v379 = vunpack.c.l.b16 %v290
        %v380 = vunpack.c.h.b16 %v290
        %v381 = vunpack.c.l.b16 %v291
        %v382 = vunpack.c.h.b16 %v291
        %v383 = vunpack.c.l.b16 %v292
        %v384 = vunpack.c.h.b16 %v292
        %v385 = vunpack.c.l.b16 %v293
        %v386 = vunpack.c.h.b16 %v293
        %v387 = vunpack.c.l.b16 %v294
        %v388 = vunpack.c.h.b16 %v294
        %v389 = vunpack.c.l.b16 %v295
        %v390 = vunpack.c.h.b16 %v295
        %v391 = vunpack.c.l.b16 %v296
        %v392 = vunpack.c.h.b16 %v296
        %v393 = vpack.c.b16 %v333, %v329
        %v394 = vpack.c.b16 %v334, %v330
        %v395 = vpack.c.b16 %v335, %v331
        %v396 = vpack.c.b16 %v336, %v332
        %v397 = vpack.c.b16 %v341, %v337
        %v398 = vpack.c.b16 %v342, %v338
        %v399 = vpack.c.b16 %v343, %v339
        %v400 = vpack.c.b16 %v344, %v340
        %v401 = vpack.c.b16 %v349, %v345
        %v402 = vpack.c.b16 %v350, %v346
        %v403 = vpack.c.b16 %v351, %v347
        %v404 = vpack.c.b16 %v352, %v348
        %v405 = vpack.c.b16 %v357, %v353
        %v406 = vpack.c.b16 %v358, %v354
        %v407 = vpack.c.b16 %v359, %v355
        %v408 = vpack.c.b16 %v360, %v356
        %v409 = vpack.c.b16 %v365, %v361
        %v410 = vpack.c.b16 %v366, %v362
        %v411 = vpack.c.b16 %v367, %v363
        %v412 = vpack.c.b16 %v368, %v364
        %v413 = vpack.c.b16 %v373, %v369
        %v414 = vpack.c.b16 %v374, %v370
        %v415 = vpack.c.b16 %v375, %v371
        %v416 = vpack.c.b16 %v376, %v372
        %v417 = vpack.c.b16 %v381, %v377
        %v418 = vpack.c.b16 %v382, %v378
        %v419 = vpack.c.b16 %v383, %v379
        %v420 = vpack.c.b16 %v384, %v380
        %v421 = vpack.c.b16 %v389, %v385
        %v422 = vpack.c.b16 %v390, %v386
        %v423 = vpack.c.b16 %v391, %v387
        %v424 = vpack.c.b16 %v392, %v388
        %457 = vmatprep.subr.bf16.mxu0 %v422
        %458 = vmatpush1.bf16.msra.mxu0 %v421
        %459 = vmatprep.subr.bf16.mxu0 %v418
        %460 = vmatpush1.bf16.msra.mxu0 %v417
        %461 = vmatprep.subr.bf16.mxu0 %v414
        %462 = vmatpush1.bf16.msra.mxu0 %v413
        %463 = vmatprep.subr.bf16.mxu0 %v410
        %464 = vmatpush1.bf16.msra.mxu0 %v409
        %465 = vmatprep.subr.bf16.mxu0 %v406
        %466 = vmatpush1.bf16.msra.mxu0 %v405
        %467 = vmatprep.subr.bf16.mxu0 %v402
        %468 = vmatpush1.bf16.msra.mxu0 %v401
        %469 = vmatprep.subr.bf16.mxu0 %v398
        %470 = vmatpush1.bf16.msra.mxu0 %v397
        %471 = vmatprep.subr.bf16.mxu0 %v394
        %472 = vmatpush1.bf16.msra.mxu0 %v393
        %473 = vmatprep.subr.bf16.mxu0 0
        %474 = vmatpush2.bf16.msra.mxu0 0
        %475 = vmatprep.subr.bf16.mxu0 0
        %476 = vmatpush2.bf16.msra.mxu0 0
        %477 = vmatprep.subr.bf16.mxu0 0
        %478 = vmatpush2.bf16.msra.mxu0 0
        %479 = vmatprep.subr.bf16.mxu0 0
        %480 = vmatpush2.bf16.msra.mxu0 0
        %481 = vmatprep.subr.bf16.mxu0 0
        %482 = vmatpush2.bf16.msra.mxu0 0
        %483 = vmatprep.subr.bf16.mxu0 0
        %484 = vmatpush2.bf16.msra.mxu0 0
        %485 = vmatprep.subr.bf16.mxu0 0
        %486 = vmatpush2.bf16.msra.mxu0 0
        %487 = vmatprep.subr.bf16.mxu0 0
        %488 = vmatpush2.bf16.msra.mxu0 0
        %489 = vmatprep.mubr.bf16.mxu0 0
        %490 = vmatmul.mubr.bf16.gmra.mxu0 %v264
        %v491 = vpop.f32.mrf.mxu0
        %v492 = vadd.f32 0.0, %v491
        %v493 = vpop.f32.mrf.mxu0
        %v494 = vadd.f32 0.0, %v493
        %v495 = vpop.f32.mrf.mxu0
        %v496 = vpop.f32.mrf.mxu0
        %497 = vdwg.mxu0
        %498 = vmatprep.subr.bf16.mxu0 %v424
        %499 = vmatpush1.bf16.msra.mxu0 %v423
        %500 = vmatprep.subr.bf16.mxu0 %v420
        %501 = vmatpush1.bf16.msra.mxu0 %v419
        %502 = vmatprep.subr.bf16.mxu0 %v416
        %503 = vmatpush1.bf16.msra.mxu0 %v415
        %504 = vmatprep.subr.bf16.mxu0 %v412
        %505 = vmatpush1.bf16.msra.mxu0 %v411
        %506 = vmatprep.subr.bf16.mxu0 %v408
        %507 = vmatpush1.bf16.msra.mxu0 %v407
        %508 = vmatprep.subr.bf16.mxu0 %v404
        %509 = vmatpush1.bf16.msra.mxu0 %v403
        %510 = vmatprep.subr.bf16.mxu0 %v400
        %511 = vmatpush1.bf16.msra.mxu0 %v399
        %512 = vmatprep.subr.bf16.mxu0 %v396
        %513 = vmatpush1.bf16.msra.mxu0 %v395
        %514 = vmatprep.subr.bf16.mxu0 0
        %515 = vmatpush2.bf16.msra.mxu0 0
        %516 = vmatprep.subr.bf16.mxu0 0
        %517 = vmatpush2.bf16.msra.mxu0 0
        %518 = vmatprep.subr.bf16.mxu0 0
        %519 = vmatpush2.bf16.msra.mxu0 0
        %520 = vmatprep.subr.bf16.mxu0 0
        %521 = vmatpush2.bf16.msra.mxu0 0
        %522 = vmatprep.subr.bf16.mxu0 0
        %523 = vmatpush2.bf16.msra.mxu0 0
        %524 = vmatprep.subr.bf16.mxu0 0
        %525 = vmatpush2.bf16.msra.mxu0 0
        %526 = vmatprep.subr.bf16.mxu0 0
        %527 = vmatpush2.bf16.msra.mxu0 0
        %528 = vmatprep.subr.bf16.mxu0 0
        %529 = vmatpush2.bf16.msra.mxu0 0
        %530 = vmatprep.mubr.bf16.mxu0 0
        %531 = vmatmul.mubr.bf16.gmra.mxu0 %v264
        %v532 = vpop.f32.mrf.mxu0
        %v533 = vadd.f32 0.0, %v532
        %v534 = vpop.f32.mrf.mxu0
        %v535 = vadd.f32 0.0, %v534
        %v536 = vpop.f32.mrf.mxu0
        %v537 = vpop.f32.mrf.mxu0
        %538 = vdwg.mxu0
        %v539 = vadd.f32 %v492, %v494
        %v540 = vadd.f32 %v539, %v533
        %v541 = vadd.f32 %v540, %v535
        %542 = vadd.xlane.f32.xlu0 %v541
        %v543 = vpop.xlane.xlu0 %542
        %vm544 = vcmask 7168
        %545 = vst.msk [vmem:[%s258] sm:$0xff] %vm544, %v543
        %v546 = vmul.f32 %v492, %v492
        %v547 = vmul.f32 %v494, %v494
        %v548 = vmul.f32 %v533, %v533
        %v549 = vmul.f32 %v535, %v535
        %v550 = vadd.f32 %v546, %v547
        %v551 = vadd.f32 %v550, %v548
        %v552 = vadd.f32 %v551, %v549
        %553 = vadd.xlane.f32.xlu0 %v552
        %v554 = vpop.xlane.xlu0 %553
        %555 = vst.msk [vmem:[%s262] sm:$0xff] %vm544, %v554
        %p556 = scmp.lt.s32.totalorder %s15, 1
        %s557 = scalar_select %p556, %s15, 1
        %s558 = smul.addr %s557, 8
        %s559 = scalar_lea.vmem %s2, %s558
        %p560 = scmp.lt.s32.totalorder %s15, 1
        %s561 = scalar_select %p560, %s15, 1
        %s562 = smul.addr %s561, 8
        %s563 = scalar_lea.vmem %s3, %s562
        // Predicated region
        $region52: #{conv3d_bn_forward.2} parent=46 // pred_check
          %p564 = pneg %p80
        $region53: #{conv3d_bn_forward.2} parent=46 // pred_check_branch
          %566 = sbr.rel (%p564) target = $region55
        $region54: #{conv3d_bn_forward.2} parent=46 // pred_region
          _
        $region55: #{conv3d_bn_forward.2} parent=46 // pred_fallthru
          _
        // Predicated region
        $region56: #{conv3d_bn_forward.2} parent=46 // pred_check
          %p567 = pneg %p106
        $region57: #{conv3d_bn_forward.2} parent=46 // pred_check_branch
          %569 = sbr.rel (%p567) target = $region59
        $region58: #{conv3d_bn_forward.2} parent=46 // pred_region
          _
        $region59: #{conv3d_bn_forward.2} parent=46 // pred_fallthru
          _
      $region47: #{conv3d_bn_forward.2} parent=5 // pred_fallthru
        _
      %p570 = scmp.le.s32.totalorder 2, %s10
      // Predicated region
      $region60: #{conv3d_bn_forward.2} parent=5 // pred_check
        %p571 = pneg %p570
      $region61: #{conv3d_bn_forward.2} parent=5 // pred_check_branch
        %573 = sbr.rel (%p571) target = $region63
      $region62: #{conv3d_bn_forward.2} parent=5 // pred_region
        %s574 = ssub.s32 %s10, 2
        // Predicated region
        $region64: #{conv3d_bn_forward.2} parent=62 // pred_check
          %p575 = pneg %p86
        $region65: #{conv3d_bn_forward.2} parent=62 // pred_check_branch
          %577 = sbr.rel (%p575) target = $region67
        $region66: #{conv3d_bn_forward.2} parent=62 // pred_region
          %p578 = scmp.lt.s32.totalorder %s16, 1
          %s579 = scalar_select %p578, %s16, 1
          %s580 = smul.addr %s579, 8
          %s581 = scalar_lea.vmem %s2, %s580
        $region67: #{conv3d_bn_forward.2} parent=62 // pred_fallthru
          _
        // Predicated region
        $region68: #{conv3d_bn_forward.2} parent=62 // pred_check
          %p582 = pneg %p112
        $region69: #{conv3d_bn_forward.2} parent=62 // pred_check_branch
          %584 = sbr.rel (%p582) target = $region71
        $region70: #{conv3d_bn_forward.2} parent=62 // pred_region
          %p585 = scmp.lt.s32.totalorder %s16, 1
          %s586 = scalar_select %p585, %s16, 1
          %s587 = smul.addr %s586, 8
          %s588 = scalar_lea.vmem %s3, %s587
        $region71: #{conv3d_bn_forward.2} parent=62 // pred_fallthru
          _
      $region63: #{conv3d_bn_forward.2} parent=5 // pred_fallthru
        _
    $region6: #{conv3d_bn_forward.2} parent=1 // loop_footer
      %s14 = sadd.s32 1, %s10
    $region7: #{conv3d_bn_forward.2} parent=1 // loop_footer_branch
      %9 = sbr.rel target = $region3
    $region8: #{conv3d_bn_forward.2} parent=1 // loop_exit
      _

</llo_original>
